<compile_context>
chip_gen: v7x
topology: tpu7x:2x2x1
jax: 0.10.0
libtpu: 0.0.40
codegen_flags: <defaults>
</compile_context>

<pallas_src>
import functools
import math

import jax
import jax.numpy as jnp
from jax import lax
from jax.experimental import pallas as pl
from jax.experimental.pallas import tpu as pltpu


def _attention_layer_kernel(
    q_ref, k_ref, v_ref,          # (1, tq, D), (1, S, D), (1, S, D)
    wq_ref, bq_ref,               # (D, H*dk), (1, H*dk)
    wk_ref, bk_ref,               # (D, H*dk), (1, H*dk)
    wv_ref, bv_ref,               # (D, H*dv), (1, H*dv)
    wo_ref, bo_ref,               # (H*dv, D), (1, D)
    o_ref,                        # (1, tq, D)
    ctx_ref,                      # scratch (tq, H*dv) f32
    *, scale, n_heads, d_k, d_v,
):
    cdt = jnp.bfloat16  # MXU-native operand dtype; f32 accumulation throughout.

    q_in = q_ref[0].astype(cdt)   # (tq, D)
    k_in = k_ref[0].astype(cdt)   # (S, D)
    v_in = v_ref[0].astype(cdt)   # (S, D)

    # Fused projections: one lane-dense (seq, D) @ (D, H*dh) matmul each.
    q_all = jnp.dot(q_in, wq_ref[...].astype(cdt),
                    preferred_element_type=jnp.float32) + bq_ref[...]
    k_all = jnp.dot(k_in, wk_ref[...].astype(cdt),
                    preferred_element_type=jnp.float32) + bk_ref[...]
    v_all = jnp.dot(v_in, wv_ref[...].astype(cdt),
                    preferred_element_type=jnp.float32) + bv_ref[...]

    # Per-head attention; heads sliced statically from the fused projections.
    for h in range(n_heads):
        qh = q_all[:, h * d_k:(h + 1) * d_k].astype(cdt)   # (tq, dk)
        kh = k_all[:, h * d_k:(h + 1) * d_k].astype(cdt)   # (S, dk)
        vh = v_all[:, h * d_v:(h + 1) * d_v].astype(cdt)   # (S, dv)

        # scores = q @ k^T * 1/sqrt(dk): contraction expressed directly,
        # no explicit transpose of k.
        scores = lax.dot_general(
            qh, kh, dimension_numbers=(((1,), (1,)), ((), ())),
            preferred_element_type=jnp.float32) * scale    # (tq, S)

        # Softmax over S (mask_flag=False; eval dropout is identity).
        m = jnp.max(scores, axis=-1, keepdims=True)
        e = jnp.exp(scores - m)
        a = e * pl.reciprocal(jnp.sum(e, axis=-1, keepdims=True), approx=True)

        out_h = jnp.dot(a.astype(cdt), vh,
                        preferred_element_type=jnp.float32)  # (tq, dv)
        ctx_ref[:, h * d_v:(h + 1) * d_v] = out_h

    # Single fused output projection: (tq, H*dv) @ (H*dv, D), full-depth K.
    out = jnp.dot(ctx_ref[...].astype(cdt), wo_ref[...].astype(cdt),
                  preferred_element_type=jnp.float32) + bo_ref[...]

    o_ref[0] = out.astype(o_ref.dtype)


def attention_layer(queries, keys, values, params, n_heads,
                    attn_mask=None, tau=None, delta=None):
    """Pallas implementation of AttentionLayer.forward.

    queries: (B, L, d_model), keys/values: (B, S, d_model), float32.
    Returns (out (B, L, d_model), attn=None).
    """
    del attn_mask, tau, delta  # mask_flag=False, tau/delta unused
    B, L, d_model = queries.shape
    _, S, _ = keys.shape
    H = n_heads
    hdk = params["wq"].shape[-1]
    hdv = params["wv"].shape[-1]
    d_k = hdk // H
    d_v = hdv // H
    scale = 1.0 / math.sqrt(d_k)

    # Query-tiling keeps the f32 (tq, S) scores matrix and blocks VMEM-resident
    # on all generations (v7x has only 64 MiB per TensorCore).
    tq = L if L <= 256 else 256
    nq = pl.cdiv(L, tq)
    grid = (B, nq)

    kernel = functools.partial(
        _attention_layer_kernel, scale=scale, n_heads=H, d_k=d_k, d_v=d_v)

    # Constant-index weight blocks: fetched from HBM once, stay VMEM-resident.
    def const_spec(shape):
        return pl.BlockSpec(shape, lambda b, t: (0,) * len(shape))

    out = pl.pallas_call(
        kernel,
        out_shape=jax.ShapeDtypeStruct((B, L, d_model), queries.dtype),
        grid_spec=pltpu.PrefetchScalarGridSpec(
            num_scalar_prefetch=0,
            grid=grid,
            in_specs=[
                pl.BlockSpec((1, tq, d_model), lambda b, t: (b, t, 0)),  # q
                pl.BlockSpec((1, S, d_model), lambda b, t: (b, 0, 0)),   # k
                pl.BlockSpec((1, S, d_model), lambda b, t: (b, 0, 0)),   # v
                const_spec((d_model, hdk)), const_spec((1, hdk)),        # Wq,bq
                const_spec((d_model, hdk)), const_spec((1, hdk)),        # Wk,bk
                const_spec((d_model, hdv)), const_spec((1, hdv)),        # Wv,bv
                const_spec((hdv, d_model)), const_spec((1, d_model)),    # Wo,bo
            ],
            out_specs=pl.BlockSpec((1, tq, d_model), lambda b, t: (b, t, 0)),
            scratch_shapes=[pltpu.VMEM((tq, hdv), jnp.float32)],
        ),
        compiler_params=pltpu.CompilerParams(
            dimension_semantics=("parallel", "parallel"),
            vmem_limit_bytes=64 * 1024 * 1024,
        ),
    )(
        queries, keys, values,
        params["wq"], params["bq"],
        params["wk"], params["bk"],
        params["wv"], params["bv"],
        params["wo"], params["bo"],
    )
    return out, None  # output_attention=False -> attn is None


def init_params(key, d_model, n_heads, d_keys=None, d_values=None):
    d_keys = d_keys or d_model // n_heads
    d_values = d_values or d_model // n_heads
    ks = jax.random.split(key, 8)
    s = 0.1
    # Fused (all-heads) layout: W* (d_model, H*d_head), b* (1, H*d_head),
    # Wo (H*d_values, d_model), bo (1, d_model) -- same as nn.Linear (x @ W + b).
    return {
        "wq": s * jax.random.normal(ks[0], (d_model, n_heads * d_keys), jnp.float32),
        "bq": s * jax.random.normal(ks[1], (1, n_heads * d_keys), jnp.float32),
        "wk": s * jax.random.normal(ks[2], (d_model, n_heads * d_keys), jnp.float32),
        "bk": s * jax.random.normal(ks[3], (1, n_heads * d_keys), jnp.float32),
        "wv": s * jax.random.normal(ks[4], (d_model, n_heads * d_values), jnp.float32),
        "bv": s * jax.random.normal(ks[5], (1, n_heads * d_values), jnp.float32),
        "wo": s * jax.random.normal(ks[6], (n_heads * d_values, d_model), jnp.float32),
        "bo": s * jax.random.normal(ks[7], (1, d_model), jnp.float32),
    }


def reference_jax(queries, keys, values, params, n_heads):
    """Plain-JAX reference matching the PyTorch forward (FullAttention, no mask)."""
    B, L, _ = queries.shape
    _, S, _ = keys.shape
    H = n_heads
    d_k = params["wq"].shape[-1] // H
    d_v = params["wv"].shape[-1] // H
    q = (queries @ params["wq"] + params["bq"]).reshape(B, L, H, d_k)
    k = (keys @ params["wk"] + params["bk"]).reshape(B, S, H, d_k)
    v = (values @ params["wv"] + params["bv"]).reshape(B, S, H, d_v)
    scores = jnp.einsum("blhe,bshe->bhls", q, k) / math.sqrt(d_k)
    a = jax.nn.softmax(scores, axis=-1)
    out = jnp.einsum("bhls,bshd->blhd", a, v).reshape(B, L, H * d_v)
    return out @ params["wo"] + params["bo"]


if __name__ == "__main__":
    B, L, S, d_model, n_heads = 2, 8, 8, 32, 4

    key = jax.random.PRNGKey(0)
    kq, kk, kv, kp = jax.random.split(key, 4)
    queries = jax.random.normal(kq, (B, L, d_model), jnp.float32)
    keys = jax.random.normal(kk, (B, S, d_model), jnp.float32)
    values = jax.random.normal(kv, (B, S, d_model), jnp.float32)
    params = init_params(kp, d_model, n_heads)

    out, attn = attention_layer(queries, keys, values, params, n_heads)
    out = jax.block_until_ready(out)

    ref = reference_jax(queries, keys, values, params, n_heads)
    assert out.shape == (B, L, d_model)
    assert attn is None
    # bf16 MXU operands (f32 accumulation) -> looser tolerance than pure f32.
    assert jnp.allclose(out, ref, atol=5e-2, rtol=5e-2), "mismatch vs reference"

    print("KERNEL_OK")
</pallas_src>

<mosaic_0001>
module attributes {stable_mosaic.version = 11 : i64} {
  func.func @_attention_layer_kernel(%arg0: i32, %arg1: i32, %arg2: memref<1x8x32xf32, #tpu.memory_space<vmem>>, %arg3: memref<1x8x32xf32, #tpu.memory_space<vmem>>, %arg4: memref<1x8x32xf32, #tpu.memory_space<vmem>>, %arg5: memref<32x32xf32, #tpu.memory_space<vmem>>, %arg6: memref<1x32xf32, #tpu.memory_space<vmem>>, %arg7: memref<32x32xf32, #tpu.memory_space<vmem>>, %arg8: memref<1x32xf32, #tpu.memory_space<vmem>>, %arg9: memref<32x32xf32, #tpu.memory_space<vmem>>, %arg10: memref<1x32xf32, #tpu.memory_space<vmem>>, %arg11: memref<32x32xf32, #tpu.memory_space<vmem>>, %arg12: memref<1x32xf32, #tpu.memory_space<vmem>>, %arg13: memref<1x8x32xf32, #tpu.memory_space<vmem>>, %arg14: memref<8x32xf32, #tpu.memory_space<vmem>>) attributes {dimension_semantics = [#tpu.dimension_semantics<parallel>, #tpu.dimension_semantics<parallel>], iteration_bounds = array<i64: 2, 1>, scalar_prefetch = 0 : i64, scratch_operands = 1 : i64, tpu.core_type = #tpu.core_type<tc>, window_params = [{transform_indices = @transform_0, window_bounds = array<i64: 1, 8, 32>}, {transform_indices = @transform_1, window_bounds = array<i64: 1, 8, 32>}, {transform_indices = @transform_2, window_bounds = array<i64: 1, 8, 32>}, {pipeline_mode = #tpu.pipeline_mode<synchronous>, transform_indices = @transform_3, window_bounds = array<i64: 32, 32>}, {pipeline_mode = #tpu.pipeline_mode<synchronous>, transform_indices = @transform_4, window_bounds = array<i64: 1, 32>}, {pipeline_mode = #tpu.pipeline_mode<synchronous>, transform_indices = @transform_5, window_bounds = array<i64: 32, 32>}, {pipeline_mode = #tpu.pipeline_mode<synchronous>, transform_indices = @transform_6, window_bounds = array<i64: 1, 32>}, {pipeline_mode = #tpu.pipeline_mode<synchronous>, transform_indices = @transform_7, window_bounds = array<i64: 32, 32>}, {pipeline_mode = #tpu.pipeline_mode<synchronous>, transform_indices = @transform_8, window_bounds = array<i64: 1, 32>}, {pipeline_mode = #tpu.pipeline_mode<synchronous>, transform_indices = @transform_9, window_bounds = array<i64: 32, 32>}, {pipeline_mode = #tpu.pipeline_mode<synchronous>, transform_indices = @transform_10, window_bounds = array<i64: 1, 32>}, {transform_indices = @transform_11, window_bounds = array<i64: 1, 8, 32>}]} {
    %c0 = arith.constant 0 : index
    %c0_0 = arith.constant 0 : index
    %c0_1 = arith.constant 0 : index
    %0 = vector.load %arg2[%c0, %c0_0, %c0_1] : memref<1x8x32xf32, #tpu.memory_space<vmem>>, vector<1x8x32xf32>
    %1 = vector.shape_cast %0 : vector<1x8x32xf32> to vector<8x32xf32>
    %2 = arith.truncf %1 : vector<8x32xf32> to vector<8x32xbf16>
    %c0_2 = arith.constant 0 : index
    %c0_3 = arith.constant 0 : index
    %c0_4 = arith.constant 0 : index
    %3 = vector.load %arg3[%c0_2, %c0_3, %c0_4] : memref<1x8x32xf32, #tpu.memory_space<vmem>>, vector<1x8x32xf32>
    %4 = vector.shape_cast %3 : vector<1x8x32xf32> to vector<8x32xf32>
    %5 = arith.truncf %4 : vector<8x32xf32> to vector<8x32xbf16>
    %c0_5 = arith.constant 0 : index
    %c0_6 = arith.constant 0 : index
    %c0_7 = arith.constant 0 : index
    %6 = vector.load %arg4[%c0_5, %c0_6, %c0_7] : memref<1x8x32xf32, #tpu.memory_space<vmem>>, vector<1x8x32xf32>
    %7 = vector.shape_cast %6 : vector<1x8x32xf32> to vector<8x32xf32>
    %8 = arith.truncf %7 : vector<8x32xf32> to vector<8x32xbf16>
    %c0_8 = arith.constant 0 : index
    %c0_9 = arith.constant 0 : index
    %9 = vector.load %arg5[%c0_8, %c0_9] : memref<32x32xf32, #tpu.memory_space<vmem>>, vector<32x32xf32>
    %10 = arith.truncf %9 : vector<32x32xf32> to vector<32x32xbf16>
    %cst = arith.constant dense<0.000000e+00> : vector<8x32xf32>
    %11 = tpu.matmul %2, %10, %cst {dimension_numbers = #tpu.dot_dimension_numbers<[1], [0], [0], [1], [0, 0, 1, 1], [], []>} : vector<8x32xbf16>, vector<32x32xbf16>, vector<8x32xf32> -> vector<8x32xf32>
    %c0_10 = arith.constant 0 : index
    %c0_11 = arith.constant 0 : index
    %12 = vector.load %arg6[%c0_10, %c0_11] : memref<1x32xf32, #tpu.memory_space<vmem>>, vector<1x32xf32>
    %13 = vector.broadcast %12 : vector<1x32xf32> to vector<8x32xf32>
    %14 = arith.addf %11, %13 : vector<8x32xf32>
    %c0_12 = arith.constant 0 : index
    %c0_13 = arith.constant 0 : index
    %15 = vector.load %arg7[%c0_12, %c0_13] : memref<32x32xf32, #tpu.memory_space<vmem>>, vector<32x32xf32>
    %16 = arith.truncf %15 : vector<32x32xf32> to vector<32x32xbf16>
    %cst_14 = arith.constant dense<0.000000e+00> : vector<8x32xf32>
    %17 = tpu.matmul %5, %16, %cst_14 {dimension_numbers = #tpu.dot_dimension_numbers<[1], [0], [0], [1], [0, 0, 1, 1], [], []>} : vector<8x32xbf16>, vector<32x32xbf16>, vector<8x32xf32> -> vector<8x32xf32>
    %c0_15 = arith.constant 0 : index
    %c0_16 = arith.constant 0 : index
    %18 = vector.load %arg8[%c0_15, %c0_16] : memref<1x32xf32, #tpu.memory_space<vmem>>, vector<1x32xf32>
    %19 = vector.broadcast %18 : vector<1x32xf32> to vector<8x32xf32>
    %20 = arith.addf %17, %19 : vector<8x32xf32>
    %c0_17 = arith.constant 0 : index
    %c0_18 = arith.constant 0 : index
    %21 = vector.load %arg9[%c0_17, %c0_18] : memref<32x32xf32, #tpu.memory_space<vmem>>, vector<32x32xf32>
    %22 = arith.truncf %21 : vector<32x32xf32> to vector<32x32xbf16>
    %cst_19 = arith.constant dense<0.000000e+00> : vector<8x32xf32>
    %23 = tpu.matmul %8, %22, %cst_19 {dimension_numbers = #tpu.dot_dimension_numbers<[1], [0], [0], [1], [0, 0, 1, 1], [], []>} : vector<8x32xbf16>, vector<32x32xbf16>, vector<8x32xf32> -> vector<8x32xf32>
    %c0_20 = arith.constant 0 : index
    %c0_21 = arith.constant 0 : index
    %24 = vector.load %arg10[%c0_20, %c0_21] : memref<1x32xf32, #tpu.memory_space<vmem>>, vector<1x32xf32>
    %25 = vector.broadcast %24 : vector<1x32xf32> to vector<8x32xf32>
    %26 = arith.addf %23, %25 : vector<8x32xf32>
    %27 = vector.extract_strided_slice %14 {offsets = [0, 0], sizes = [8, 8], strides = [1, 1]} : vector<8x32xf32> to vector<8x8xf32>
    %28 = arith.truncf %27 : vector<8x8xf32> to vector<8x8xbf16>
    %29 = vector.extract_strided_slice %20 {offsets = [0, 0], sizes = [8, 8], strides = [1, 1]} : vector<8x32xf32> to vector<8x8xf32>
    %30 = arith.truncf %29 : vector<8x8xf32> to vector<8x8xbf16>
    %31 = vector.extract_strided_slice %26 {offsets = [0, 0], sizes = [8, 8], strides = [1, 1]} : vector<8x32xf32> to vector<8x8xf32>
    %32 = arith.truncf %31 : vector<8x8xf32> to vector<8x8xbf16>
    %cst_22 = arith.constant dense<0.000000e+00> : vector<8x8xf32>
    %33 = tpu.matmul %28, %30, %cst_22 {dimension_numbers = #tpu.dot_dimension_numbers<[1], [1], [0], [0], [0, 0, 1, 0], [], []>} : vector<8x8xbf16>, vector<8x8xbf16>, vector<8x8xf32> -> vector<8x8xf32>
    %cst_23 = arith.constant 0.353553385 : f32
    %34 = vector.broadcast %cst_23 : f32 to vector<8x8xf32>
    %35 = arith.mulf %33, %34 : vector<8x8xf32>
    %cst_24 = arith.constant dense<0xFF800000> : vector<8xf32>
    %36 = vector.multi_reduction <maximumf>, %35, %cst_24 [1] : vector<8x8xf32> to vector<8xf32>
    %37 = vector.shape_cast %36 : vector<8xf32> to vector<8x1xf32>
    %38 = vector.broadcast %37 : vector<8x1xf32> to vector<8x8xf32>
    %39 = arith.subf %35, %38 : vector<8x8xf32>
    %40 = math.exp %39 : vector<8x8xf32>
    %cst_25 = arith.constant dense<0.000000e+00> : vector<8xf32>
    %41 = vector.multi_reduction <add>, %40, %cst_25 [1] : vector<8x8xf32> to vector<8xf32>
    %42 = vector.shape_cast %41 : vector<8xf32> to vector<8x1xf32>
    %43 = tpu.reciprocal %42 {approx = true} : vector<8x1xf32> -> vector<8x1xf32>
    %44 = vector.broadcast %43 : vector<8x1xf32> to vector<8x8xf32>
    %45 = arith.mulf %40, %44 : vector<8x8xf32>
    %46 = arith.truncf %45 : vector<8x8xf32> to vector<8x8xbf16>
    %cst_26 = arith.constant dense<0.000000e+00> : vector<8x8xf32>
    %47 = tpu.matmul %46, %32, %cst_26 {dimension_numbers = #tpu.dot_dimension_numbers<[1], [0], [0], [1], [0, 0, 1, 1], [], []>} : vector<8x8xbf16>, vector<8x8xbf16>, vector<8x8xf32> -> vector<8x8xf32>
    %c0_27 = arith.constant 0 : index
    %c0_28 = arith.constant 0 : index
    %48 = vector.load %arg14[%c0_27, %c0_28] : memref<8x32xf32, #tpu.memory_space<vmem>>, vector<8x8xf32>
    tpu.vector_store %arg14[%c0_27, %c0_28], %47 {strides = array<i32>} : memref<8x32xf32, #tpu.memory_space<vmem>>, vector<8x8xf32>,
    %49 = vector.extract_strided_slice %14 {offsets = [0, 8], sizes = [8, 8], strides = [1, 1]} : vector<8x32xf32> to vector<8x8xf32>
    %50 = arith.truncf %49 : vector<8x8xf32> to vector<8x8xbf16>
    %51 = vector.extract_strided_slice %20 {offsets = [0, 8], sizes = [8, 8], strides = [1, 1]} : vector<8x32xf32> to vector<8x8xf32>
    %52 = arith.truncf %51 : vector<8x8xf32> to vector<8x8xbf16>
    %53 = vector.extract_strided_slice %26 {offsets = [0, 8], sizes = [8, 8], strides = [1, 1]} : vector<8x32xf32> to vector<8x8xf32>
    %54 = arith.truncf %53 : vector<8x8xf32> to vector<8x8xbf16>
    %cst_29 = arith.constant dense<0.000000e+00> : vector<8x8xf32>
    %55 = tpu.matmul %50, %52, %cst_29 {dimension_numbers = #tpu.dot_dimension_numbers<[1], [1], [0], [0], [0, 0, 1, 0], [], []>} : vector<8x8xbf16>, vector<8x8xbf16>, vector<8x8xf32> -> vector<8x8xf32>
    %cst_30 = arith.constant 0.353553385 : f32
    %56 = vector.broadcast %cst_30 : f32 to vector<8x8xf32>
    %57 = arith.mulf %55, %56 : vector<8x8xf32>
    %cst_31 = arith.constant dense<0xFF800000> : vector<8xf32>
    %58 = vector.multi_reduction <maximumf>, %57, %cst_31 [1] : vector<8x8xf32> to vector<8xf32>
    %59 = vector.shape_cast %58 : vector<8xf32> to vector<8x1xf32>
    %60 = vector.broadcast %59 : vector<8x1xf32> to vector<8x8xf32>
    %61 = arith.subf %57, %60 : vector<8x8xf32>
    %62 = math.exp %61 : vector<8x8xf32>
    %cst_32 = arith.constant dense<0.000000e+00> : vector<8xf32>
    %63 = vector.multi_reduction <add>, %62, %cst_32 [1] : vector<8x8xf32> to vector<8xf32>
    %64 = vector.shape_cast %63 : vector<8xf32> to vector<8x1xf32>
    %65 = tpu.reciprocal %64 {approx = true} : vector<8x1xf32> -> vector<8x1xf32>
    %66 = vector.broadcast %65 : vector<8x1xf32> to vector<8x8xf32>
    %67 = arith.mulf %62, %66 : vector<8x8xf32>
    %68 = arith.truncf %67 : vector<8x8xf32> to vector<8x8xbf16>
    %cst_33 = arith.constant dense<0.000000e+00> : vector<8x8xf32>
    %69 = tpu.matmul %68, %54, %cst_33 {dimension_numbers = #tpu.dot_dimension_numbers<[1], [0], [0], [1], [0, 0, 1, 1], [], []>} : vector<8x8xbf16>, vector<8x8xbf16>, vector<8x8xf32> -> vector<8x8xf32>
    %c0_34 = arith.constant 0 : index
    %c8 = arith.constant 8 : index
    %70 = vector.load %arg14[%c0_34, %c8] : memref<8x32xf32, #tpu.memory_space<vmem>>, vector<8x8xf32>
    tpu.vector_store %arg14[%c0_34, %c8], %69 {strides = array<i32>} : memref<8x32xf32, #tpu.memory_space<vmem>>, vector<8x8xf32>,
    %71 = vector.extract_strided_slice %14 {offsets = [0, 16], sizes = [8, 8], strides = [1, 1]} : vector<8x32xf32> to vector<8x8xf32>
    %72 = arith.truncf %71 : vector<8x8xf32> to vector<8x8xbf16>
    %73 = vector.extract_strided_slice %20 {offsets = [0, 16], sizes = [8, 8], strides = [1, 1]} : vector<8x32xf32> to vector<8x8xf32>
    %74 = arith.truncf %73 : vector<8x8xf32> to vector<8x8xbf16>
    %75 = vector.extract_strided_slice %26 {offsets = [0, 16], sizes = [8, 8], strides = [1, 1]} : vector<8x32xf32> to vector<8x8xf32>
    %76 = arith.truncf %75 : vector<8x8xf32> to vector<8x8xbf16>
    %cst_35 = arith.constant dense<0.000000e+00> : vector<8x8xf32>
    %77 = tpu.matmul %72, %74, %cst_35 {dimension_numbers = #tpu.dot_dimension_numbers<[1], [1], [0], [0], [0, 0, 1, 0], [], []>} : vector<8x8xbf16>, vector<8x8xbf16>, vector<8x8xf32> -> vector<8x8xf32>
    %cst_36 = arith.constant 0.353553385 : f32
    %78 = vector.broadcast %cst_36 : f32 to vector<8x8xf32>
    %79 = arith.mulf %77, %78 : vector<8x8xf32>
    %cst_37 = arith.constant dense<0xFF800000> : vector<8xf32>
    %80 = vector.multi_reduction <maximumf>, %79, %cst_37 [1] : vector<8x8xf32> to vector<8xf32>
    %81 = vector.shape_cast %80 : vector<8xf32> to vector<8x1xf32>
    %82 = vector.broadcast %81 : vector<8x1xf32> to vector<8x8xf32>
    %83 = arith.subf %79, %82 : vector<8x8xf32>
    %84 = math.exp %83 : vector<8x8xf32>
    %cst_38 = arith.constant dense<0.000000e+00> : vector<8xf32>
    %85 = vector.multi_reduction <add>, %84, %cst_38 [1] : vector<8x8xf32> to vector<8xf32>
    %86 = vector.shape_cast %85 : vector<8xf32> to vector<8x1xf32>
    %87 = tpu.reciprocal %86 {approx = true} : vector<8x1xf32> -> vector<8x1xf32>
    %88 = vector.broadcast %87 : vector<8x1xf32> to vector<8x8xf32>
    %89 = arith.mulf %84, %88 : vector<8x8xf32>
    %90 = arith.truncf %89 : vector<8x8xf32> to vector<8x8xbf16>
    %cst_39 = arith.constant dense<0.000000e+00> : vector<8x8xf32>
    %91 = tpu.matmul %90, %76, %cst_39 {dimension_numbers = #tpu.dot_dimension_numbers<[1], [0], [0], [1], [0, 0, 1, 1], [], []>} : vector<8x8xbf16>, vector<8x8xbf16>, vector<8x8xf32> -> vector<8x8xf32>
    %c0_40 = arith.constant 0 : index
    %c16 = arith.constant 16 : index
    %92 = vector.load %arg14[%c0_40, %c16] : memref<8x32xf32, #tpu.memory_space<vmem>>, vector<8x8xf32>
    tpu.vector_store %arg14[%c0_40, %c16], %91 {strides = array<i32>} : memref<8x32xf32, #tpu.memory_space<vmem>>, vector<8x8xf32>,
    %93 = vector.extract_strided_slice %14 {offsets = [0, 24], sizes = [8, 8], strides = [1, 1]} : vector<8x32xf32> to vector<8x8xf32>
    %94 = arith.truncf %93 : vector<8x8xf32> to vector<8x8xbf16>
    %95 = vector.extract_strided_slice %20 {offsets = [0, 24], sizes = [8, 8], strides = [1, 1]} : vector<8x32xf32> to vector<8x8xf32>
    %96 = arith.truncf %95 : vector<8x8xf32> to vector<8x8xbf16>
    %97 = vector.extract_strided_slice %26 {offsets = [0, 24], sizes = [8, 8], strides = [1, 1]} : vector<8x32xf32> to vector<8x8xf32>
    %98 = arith.truncf %97 : vector<8x8xf32> to vector<8x8xbf16>
    %cst_41 = arith.constant dense<0.000000e+00> : vector<8x8xf32>
    %99 = tpu.matmul %94, %96, %cst_41 {dimension_numbers = #tpu.dot_dimension_numbers<[1], [1], [0], [0], [0, 0, 1, 0], [], []>} : vector<8x8xbf16>, vector<8x8xbf16>, vector<8x8xf32> -> vector<8x8xf32>
    %cst_42 = arith.constant 0.353553385 : f32
    %100 = vector.broadcast %cst_42 : f32 to vector<8x8xf32>
    %101 = arith.mulf %99, %100 : vector<8x8xf32>
    %cst_43 = arith.constant dense<0xFF800000> : vector<8xf32>
    %102 = vector.multi_reduction <maximumf>, %101, %cst_43 [1] : vector<8x8xf32> to vector<8xf32>
    %103 = vector.shape_cast %102 : vector<8xf32> to vector<8x1xf32>
    %104 = vector.broadcast %103 : vector<8x1xf32> to vector<8x8xf32>
    %105 = arith.subf %101, %104 : vector<8x8xf32>
    %106 = math.exp %105 : vector<8x8xf32>
    %cst_44 = arith.constant dense<0.000000e+00> : vector<8xf32>
    %107 = vector.multi_reduction <add>, %106, %cst_44 [1] : vector<8x8xf32> to vector<8xf32>
    %108 = vector.shape_cast %107 : vector<8xf32> to vector<8x1xf32>
    %109 = tpu.reciprocal %108 {approx = true} : vector<8x1xf32> -> vector<8x1xf32>
    %110 = vector.broadcast %109 : vector<8x1xf32> to vector<8x8xf32>
    %111 = arith.mulf %106, %110 : vector<8x8xf32>
    %112 = arith.truncf %111 : vector<8x8xf32> to vector<8x8xbf16>
    %cst_45 = arith.constant dense<0.000000e+00> : vector<8x8xf32>
    %113 = tpu.matmul %112, %98, %cst_45 {dimension_numbers = #tpu.dot_dimension_numbers<[1], [0], [0], [1], [0, 0, 1, 1], [], []>} : vector<8x8xbf16>, vector<8x8xbf16>, vector<8x8xf32> -> vector<8x8xf32>
    %c0_46 = arith.constant 0 : index
    %c24 = arith.constant 24 : index
    %114 = vector.load %arg14[%c0_46, %c24] : memref<8x32xf32, #tpu.memory_space<vmem>>, vector<8x8xf32>
    tpu.vector_store %arg14[%c0_46, %c24], %113 {strides = array<i32>} : memref<8x32xf32, #tpu.memory_space<vmem>>, vector<8x8xf32>,
    %c0_47 = arith.constant 0 : index
    %c0_48 = arith.constant 0 : index
    %115 = vector.load %arg14[%c0_47, %c0_48] : memref<8x32xf32, #tpu.memory_space<vmem>>, vector<8x32xf32>
    %116 = arith.truncf %115 : vector<8x32xf32> to vector<8x32xbf16>
    %c0_49 = arith.constant 0 : index
    %c0_50 = arith.constant 0 : index
    %117 = vector.load %arg11[%c0_49, %c0_50] : memref<32x32xf32, #tpu.memory_space<vmem>>, vector<32x32xf32>
    %118 = arith.truncf %117 : vector<32x32xf32> to vector<32x32xbf16>
    %cst_51 = arith.constant dense<0.000000e+00> : vector<8x32xf32>
    %119 = tpu.matmul %116, %118, %cst_51 {dimension_numbers = #tpu.dot_dimension_numbers<[1], [0], [0], [1], [0, 0, 1, 1], [], []>} : vector<8x32xbf16>, vector<32x32xbf16>, vector<8x32xf32> -> vector<8x32xf32>
    %c0_52 = arith.constant 0 : index
    %c0_53 = arith.constant 0 : index
    %120 = vector.load %arg12[%c0_52, %c0_53] : memref<1x32xf32, #tpu.memory_space<vmem>>, vector<1x32xf32>
    %121 = vector.broadcast %120 : vector<1x32xf32> to vector<8x32xf32>
    %122 = arith.addf %119, %121 : vector<8x32xf32>
    %c0_54 = arith.constant 0 : index
    %c0_55 = arith.constant 0 : index
    %c0_56 = arith.constant 0 : index
    %123 = vector.load %arg13[%c0_54, %c0_55, %c0_56] : memref<1x8x32xf32, #tpu.memory_space<vmem>>, vector<1x8x32xf32>
    %124 = vector.shape_cast %123 : vector<1x8x32xf32> to vector<8x32xf32>
    %125 = vector.shape_cast %122 : vector<8x32xf32> to vector<1x8x32xf32>
    tpu.vector_store %arg13[%c0_54, %c0_55, %c0_56], %125 {strides = array<i32>} : memref<1x8x32xf32, #tpu.memory_space<vmem>>, vector<1x8x32xf32>,
    return
  }
  func.func @transform_0(%arg0: i32, %arg1: i32) -> (i32, i32, i32) {
    %c0_i32 = arith.constant 0 : i32
    %c0_i32_0 = arith.constant 0 : i32
    return %arg0, %arg1, %c0_i32 : i32, i32, i32
  }
  func.func @transform_1(%arg0: i32, %arg1: i32) -> (i32, i32, i32) {
    %c0_i32 = arith.constant 0 : i32
    %c0_i32_0 = arith.constant 0 : i32
    %c0_i32_1 = arith.constant 0 : i32
    return %arg0, %c0_i32, %c0_i32_0 : i32, i32, i32
  }
  func.func @transform_2(%arg0: i32, %arg1: i32) -> (i32, i32, i32) {
    %c0_i32 = arith.constant 0 : i32
    %c0_i32_0 = arith.constant 0 : i32
    %c0_i32_1 = arith.constant 0 : i32
    return %arg0, %c0_i32, %c0_i32_0 : i32, i32, i32
  }
  func.func @transform_3(%arg0: i32, %arg1: i32) -> (i32, i32) {
    %c0_i32 = arith.constant 0 : i32
    %c0_i32_0 = arith.constant 0 : i32
    %c0_i32_1 = arith.constant 0 : i32
    return %c0_i32, %c0_i32_0 : i32, i32
  }
  func.func @transform_4(%arg0: i32, %arg1: i32) -> (i32, i32) {
    %c0_i32 = arith.constant 0 : i32
    %c0_i32_0 = arith.constant 0 : i32
    %c0_i32_1 = arith.constant 0 : i32
    return %c0_i32, %c0_i32_0 : i32, i32
  }
  func.func @transform_5(%arg0: i32, %arg1: i32) -> (i32, i32) {
    %c0_i32 = arith.constant 0 : i32
    %c0_i32_0 = arith.constant 0 : i32
    %c0_i32_1 = arith.constant 0 : i32
    return %c0_i32, %c0_i32_0 : i32, i32
  }
  func.func @transform_6(%arg0: i32, %arg1: i32) -> (i32, i32) {
    %c0_i32 = arith.constant 0 : i32
    %c0_i32_0 = arith.constant 0 : i32
    %c0_i32_1 = arith.constant 0 : i32
    return %c0_i32, %c0_i32_0 : i32, i32
  }
  func.func @transform_7(%arg0: i32, %arg1: i32) -> (i32, i32) {
    %c0_i32 = arith.constant 0 : i32
    %c0_i32_0 = arith.constant 0 : i32
    %c0_i32_1 = arith.constant 0 : i32
    return %c0_i32, %c0_i32_0 : i32, i32
  }
  func.func @transform_8(%arg0: i32, %arg1: i32) -> (i32, i32) {
    %c0_i32 = arith.constant 0 : i32
    %c0_i32_0 = arith.constant 0 : i32
    %c0_i32_1 = arith.constant 0 : i32
    return %c0_i32, %c0_i32_0 : i32, i32
  }
  func.func @transform_9(%arg0: i32, %arg1: i32) -> (i32, i32) {
    %c0_i32 = arith.constant 0 : i32
    %c0_i32_0 = arith.constant 0 : i32
    %c0_i32_1 = arith.constant 0 : i32
    return %c0_i32, %c0_i32_0 : i32, i32
  }
  func.func @transform_10(%arg0: i32, %arg1: i32) -> (i32, i32) {
    %c0_i32 = arith.constant 0 : i32
    %c0_i32_0 = arith.constant 0 : i32
    %c0_i32_1 = arith.constant 0 : i32
    return %c0_i32, %c0_i32_0 : i32, i32
  }
  func.func @transform_11(%arg0: i32, %arg1: i32) -> (i32, i32, i32) {
    %c0_i32 = arith.constant 0 : i32
    %c0_i32_0 = arith.constant 0 : i32
    return %arg0, %arg1, %c0_i32 : i32, i32, i32
  }
}

</mosaic_0001>

<llo_original>
// kernel: tpu_custom_call.1
$region0: #{tpu_custom_call.1}
  #allocation0 [shape = 'u32[]', space=smem, size = 0x4, offset = 0x4, fixed_abs, tag = 'smem constant byte address 0x4 - core index']
  #allocation1 [shape = 'u32[144,128]{1,0:T(1,128)}', space=vmem, size = 0x12000, scoped, tag = 'internal scratch']
  #allocation2 [shape = 'f32[8,32]{1,0:T(8,128)}', space=vmem, size = 0x1000, scoped, tag = 'scratch operand']
  %s0 = inlined_call_operand.hbm [shape: f32[2,8,32], index: 0, kind: input, shape index: {}]
  %s1 = inlined_call_operand.hbm [shape: f32[2,8,32], index: 1, kind: input, shape index: {}]
  %s2 = inlined_call_operand.hbm [shape: f32[2,8,32], index: 2, kind: input, shape index: {}]
  %s3 = inlined_call_operand.hbm [shape: f32[32,32], index: 3, kind: input, shape index: {}]
  %s4 = inlined_call_operand.hbm [shape: f32[1,32], index: 4, kind: input, shape index: {}]
  %s5 = inlined_call_operand.hbm [shape: f32[32,32], index: 5, kind: input, shape index: {}]
  %s6 = inlined_call_operand.hbm [shape: f32[1,32], index: 6, kind: input, shape index: {}]
  %s7 = inlined_call_operand.hbm [shape: f32[32,32], index: 7, kind: input, shape index: {}]
  %s8 = inlined_call_operand.hbm [shape: f32[1,32], index: 8, kind: input, shape index: {}]
  %s9 = inlined_call_operand.hbm [shape: f32[32,32], index: 9, kind: input, shape index: {}]
  %s10 = inlined_call_operand.hbm [shape: f32[1,32], index: 10, kind: input, shape index: {}]
  %s11 = inlined_call_operand.hbm [shape: f32[2,8,32], index: 11, kind: output, shape index: {}]
  %s12 = sld [smem:[#allocation0]]
  $region121: #{tpu_custom_call.1} parent=0
    _
  %s14 = ssub.s32 1, %s12
  %s15 = scalar_select 0, %s14, %s12
  $region1: #{tpu_custom_call.1} parent=0
    #allocation3 [shape = 'u8[8192]{0}', space=vmem, size = 0x2000, scoped, tag = 'input window, operand 0']
    #allocation4 [shape = 's32[2]{0}', space=sflag, size = 0x8, scoped, tag = 'scoped memory for tpu_custom_call.1']
    #allocation5 [shape = 's32[2]{0}', space=sflag, size = 0x8, scoped, tag = 'scoped memory for tpu_custom_call.1']
    #allocation6 [shape = 'u8[8192]{0}', space=vmem, size = 0x2000, scoped, tag = 'input window, operand 1']
    #allocation7 [shape = 's32[2]{0}', space=sflag, size = 0x8, scoped, tag = 'scoped memory for tpu_custom_call.1']
    #allocation8 [shape = 'u8[8192]{0}', space=vmem, size = 0x2000, scoped, tag = 'input window, operand 2']
    #allocation9 [shape = 'u8[16384]{0}', space=vmem, size = 0x4000, scoped, tag = 'input window, operand 3, single buffered']
    #allocation10 [shape = 's32[1]{0}', space=sflag, size = 0x4, scoped, tag = 'scoped memory for tpu_custom_call.1']
    #allocation11 [shape = 'u8[512]{0}', space=vmem, size = 0x400, scoped, tag = 'input window, operand 4, single buffered']
    #allocation12 [shape = 'u8[16384]{0}', space=vmem, size = 0x4000, scoped, tag = 'input window, operand 5, single buffered']
    #allocation13 [shape = 's32[1]{0}', space=sflag, size = 0x4, scoped, tag = 'scoped memory for tpu_custom_call.1']
    #allocation14 [shape = 'u8[512]{0}', space=vmem, size = 0x400, scoped, tag = 'input window, operand 6, single buffered']
    #allocation15 [shape = 'u8[16384]{0}', space=vmem, size = 0x4000, scoped, tag = 'input window, operand 7, single buffered']
    #allocation16 [shape = 's32[1]{0}', space=sflag, size = 0x4, scoped, tag = 'scoped memory for tpu_custom_call.1']
    #allocation17 [shape = 'u8[512]{0}', space=vmem, size = 0x400, scoped, tag = 'input window, operand 8, single buffered']
    #allocation18 [shape = 'u8[16384]{0}', space=vmem, size = 0x4000, scoped, tag = 'input window, operand 9, single buffered']
    #allocation19 [shape = 's32[1]{0}', space=sflag, size = 0x4, scoped, tag = 'scoped memory for tpu_custom_call.1']
    #allocation20 [shape = 'u8[512]{0}', space=vmem, size = 0x400, scoped, tag = 'input window, operand 10, single buffered']
    #allocation21 [shape = 'u8[8192]{0}', space=vmem, size = 0x2000, scoped, tag = 'output window, operand 0']
    %16 = vsyncpa [#allocation4], 0
    %s17 = scalar_lea.sflag [#allocation4], 1
    %18 = vsyncpa %s17, 0
    %19 = vsyncpa [#allocation7], 0
    %s20 = scalar_lea.sflag [#allocation7], 1
    %21 = vsyncpa %s20, 0
    %22 = vsyncpa [#allocation10], 0
    %23 = vsyncpa [#allocation13], 0
    %24 = vsyncpa [#allocation16], 0
    %25 = vsyncpa [#allocation19], 0
    %26 = vsyncpa [#allocation5], 0
    %s27 = scalar_lea.sflag [#allocation5], 1
    %28 = vsyncpa %s27, 0
    loop: start=0, step=1, limit=4
    $region2: #{tpu_custom_call.1} parent=1 // loop_pre_header
      _
    $region3: #{tpu_custom_call.1} parent=1 // loop_header
      %s30 = sphi 0, %s34
      %p31 = scmp.ge.s32.totalorder %s30, 4
      %s37 = sphi 0, %s49
      %s38 = sphi 0, %s45
      %s39 = sphi 0, %s37
      %s40 = sphi 0, %s38
      %s41 = sphi 0, %s39
      %s42 = sphi 0, %s40
      %s54 = sphi 0, %s56
      %s57 = sphi 0, %s54
      %s58 = sphi 0, %s57
      %s74 = sphi 0, %s58
      %s80 = sphi 0, %s82
      %s83 = sphi 0, %s80
      %s84 = sphi 0, %s83
      %s100 = sphi 0, %s84
      %s106 = sphi 0, %s108
      %s109 = sphi 0, %s106
      %s110 = sphi 0, %s109
      %s126 = sphi 0, %s110
      %s130 = sphi 0, %s130
      %s132 = sphi 0, %s130
      %s133 = sphi 0, %s132
      %s147 = sphi 0, %s133
      %s151 = sphi 0, %s151
      %s153 = sphi 0, %s151
      %s154 = sphi 0, %s153
      %s168 = sphi 0, %s154
      %s172 = sphi 0, %s172
      %s174 = sphi 0, %s172
      %s175 = sphi 0, %s174
      %s189 = sphi 0, %s175
      %s193 = sphi 0, %s193
      %s195 = sphi 0, %s193
      %s196 = sphi 0, %s195
      %s210 = sphi 0, %s196
      %s214 = sphi 0, %s214
      %s216 = sphi 0, %s214
      %s217 = sphi 0, %s216
      %s231 = sphi 0, %s217
      %s235 = sphi 0, %s235
      %s237 = sphi 0, %s235
      %s238 = sphi 0, %s237
      %s252 = sphi 0, %s238
      %s256 = sphi 0, %s256
      %s258 = sphi 0, %s256
      %s259 = sphi 0, %s258
      %s273 = sphi 0, %s259
      %s277 = sphi 0, %s277
      %s279 = sphi 0, %s277
      %s280 = sphi 0, %s279
      %s294 = sphi 0, %s280
      %s302 = sphi 0, %s304
      %s305 = sphi 0, %s302
      %s306 = sphi 0, %s305
      %s322 = sphi 0, %s306
    $region4: #{tpu_custom_call.1} parent=1 // loop_header_branch
      %33 = sbr.rel (%p31) target = $region8
    $region5: #{tpu_custom_call.1} parent=1 // loop_body
      %s35 = ssub.s32 %s30, 1
      %s36 = ssub.s32 %s30, 2
      %s43 = sadd.s32 1, %s38
      %p44 = scmp.ge.s32.totalorder %s43, 1
      %s45 = scalar_select %p44, 0, %s43
      %s46 = sadd.s32 1, %s37
      %s47 = scalar_select %p44, %s46, %s37
      %p48 = scmp.ge.s32.totalorder %s47, 2
      %s49 = scalar_select %p48, 0, %s47
      %s50 = ssub.s32 %s37, %s49
      %s51 = ssub.s32 %s38, %s45
      %s52 = sor.u32 %s50, %s51
      %p53 = scmp.eq.s32.totalorder %s52, 0
      %s55 = sadd.s32 %s54, 1
      %s56 = scalar_select %p53, %s54, %s55
      %p59 = pneg %p53
      %p60 = scmp.eq.s32.totalorder %s30, 1
      %p61 = por %p59, %p60
      %p62 = scmp.ne.s32.totalorder %s54, %s57
      %p63 = scmp.eq.s32.totalorder %s30, 0
      %p64 = por %p62, %p63
      %p65 = scmp.ne.s32.totalorder %s54, %s57
      %p66 = scmp.eq.s32.totalorder %s35, 1
      %p67 = por %p65, %p66
      %p68 = scmp.ne.s32.totalorder %s57, %s58
      %p69 = scmp.eq.s32.totalorder %s35, 0
      %p70 = por %p68, %p69
      %p71 = scmp.ne.s32.totalorder %s57, %s58
      %p72 = scmp.eq.s32.totalorder %s36, 1
      %p73 = por %p71, %p72
      %p75 = scmp.ne.s32.totalorder %s58, %s74
      %p76 = scmp.eq.s32.totalorder %s36, 0
      %p77 = por %p75, %p76
      %s78 = ssub.s32 %s37, %s49
      %p79 = scmp.eq.s32.totalorder %s78, 0
      %s81 = sadd.s32 %s80, 1
      %s82 = scalar_select %p79, %s80, %s81
      %p85 = pneg %p79
      %p86 = scmp.eq.s32.totalorder %s30, 1
      %p87 = por %p85, %p86
      %p88 = scmp.ne.s32.totalorder %s80, %s83
      %p89 = scmp.eq.s32.totalorder %s30, 0
      %p90 = por %p88, %p89
      %p91 = scmp.ne.s32.totalorder %s80, %s83
      %p92 = scmp.eq.s32.totalorder %s35, 1
      %p93 = por %p91, %p92
      %p94 = scmp.ne.s32.totalorder %s83, %s84
      %p95 = scmp.eq.s32.totalorder %s35, 0
      %p96 = por %p94, %p95
      %p97 = scmp.ne.s32.totalorder %s83, %s84
      %p98 = scmp.eq.s32.totalorder %s36, 1
      %p99 = por %p97, %p98
      %p101 = scmp.ne.s32.totalorder %s84, %s100
      %p102 = scmp.eq.s32.totalorder %s36, 0
      %p103 = por %p101, %p102
      %s104 = ssub.s32 %s37, %s49
      %p105 = scmp.eq.s32.totalorder %s104, 0
      %s107 = sadd.s32 %s106, 1
      %s108 = scalar_select %p105, %s106, %s107
      %p111 = pneg %p105
      %p112 = scmp.eq.s32.totalorder %s30, 1
      %p113 = por %p111, %p112
      %p114 = scmp.ne.s32.totalorder %s106, %s109
      %p115 = scmp.eq.s32.totalorder %s30, 0
      %p116 = por %p114, %p115
      %p117 = scmp.ne.s32.totalorder %s106, %s109
      %p118 = scmp.eq.s32.totalorder %s35, 1
      %p119 = por %p117, %p118
      %p120 = scmp.ne.s32.totalorder %s109, %s110
      %p121 = scmp.eq.s32.totalorder %s35, 0
      %p122 = por %p120, %p121
      %p123 = scmp.ne.s32.totalorder %s109, %s110
      %p124 = scmp.eq.s32.totalorder %s36, 1
      %p125 = por %p123, %p124
      %p127 = scmp.ne.s32.totalorder %s110, %s126
      %p128 = scmp.eq.s32.totalorder %s36, 0
      %p129 = por %p127, %p128
      %s131 = sadd.s32 %s130, 1
      %p134 = scmp.eq.s32.totalorder %s30, 1
      %p135 = scmp.ne.s32.totalorder %s130, %s132
      %p136 = scmp.eq.s32.totalorder %s30, 0
      %p137 = por %p135, %p136
      %p138 = scmp.ne.s32.totalorder %s130, %s132
      %p139 = scmp.eq.s32.totalorder %s35, 1
      %p140 = por %p138, %p139
      %p141 = scmp.ne.s32.totalorder %s132, %s133
      %p142 = scmp.eq.s32.totalorder %s35, 0
      %p143 = por %p141, %p142
      %p144 = scmp.ne.s32.totalorder %s132, %s133
      %p145 = scmp.eq.s32.totalorder %s36, 1
      %p146 = por %p144, %p145
      %p148 = scmp.ne.s32.totalorder %s133, %s147
      %p149 = scmp.eq.s32.totalorder %s36, 0
      %p150 = por %p148, %p149
      %s152 = sadd.s32 %s151, 1
      %p155 = scmp.eq.s32.totalorder %s30, 1
      %p156 = scmp.ne.s32.totalorder %s151, %s153
      %p157 = scmp.eq.s32.totalorder %s30, 0
      %p158 = por %p156, %p157
      %p159 = scmp.ne.s32.totalorder %s151, %s153
      %p160 = scmp.eq.s32.totalorder %s35, 1
      %p161 = por %p159, %p160
      %p162 = scmp.ne.s32.totalorder %s153, %s154
      %p163 = scmp.eq.s32.totalorder %s35, 0
      %p164 = por %p162, %p163
      %p165 = scmp.ne.s32.totalorder %s153, %s154
      %p166 = scmp.eq.s32.totalorder %s36, 1
      %p167 = por %p165, %p166
      %p169 = scmp.ne.s32.totalorder %s154, %s168
      %p170 = scmp.eq.s32.totalorder %s36, 0
      %p171 = por %p169, %p170
      %s173 = sadd.s32 %s172, 1
      %p176 = scmp.eq.s32.totalorder %s30, 1
      %p177 = scmp.ne.s32.totalorder %s172, %s174
      %p178 = scmp.eq.s32.totalorder %s30, 0
      %p179 = por %p177, %p178
      %p180 = scmp.ne.s32.totalorder %s172, %s174
      %p181 = scmp.eq.s32.totalorder %s35, 1
      %p182 = por %p180, %p181
      %p183 = scmp.ne.s32.totalorder %s174, %s175
      %p184 = scmp.eq.s32.totalorder %s35, 0
      %p185 = por %p183, %p184
      %p186 = scmp.ne.s32.totalorder %s174, %s175
      %p187 = scmp.eq.s32.totalorder %s36, 1
      %p188 = por %p186, %p187
      %p190 = scmp.ne.s32.totalorder %s175, %s189
      %p191 = scmp.eq.s32.totalorder %s36, 0
      %p192 = por %p190, %p191
      %s194 = sadd.s32 %s193, 1
      %p197 = scmp.eq.s32.totalorder %s30, 1
      %p198 = scmp.ne.s32.totalorder %s193, %s195
      %p199 = scmp.eq.s32.totalorder %s30, 0
      %p200 = por %p198, %p199
      %p201 = scmp.ne.s32.totalorder %s193, %s195
      %p202 = scmp.eq.s32.totalorder %s35, 1
      %p203 = por %p201, %p202
      %p204 = scmp.ne.s32.totalorder %s195, %s196
      %p205 = scmp.eq.s32.totalorder %s35, 0
      %p206 = por %p204, %p205
      %p207 = scmp.ne.s32.totalorder %s195, %s196
      %p208 = scmp.eq.s32.totalorder %s36, 1
      %p209 = por %p207, %p208
      %p211 = scmp.ne.s32.totalorder %s196, %s210
      %p212 = scmp.eq.s32.totalorder %s36, 0
      %p213 = por %p211, %p212
      %s215 = sadd.s32 %s214, 1
      %p218 = scmp.eq.s32.totalorder %s30, 1
      %p219 = scmp.ne.s32.totalorder %s214, %s216
      %p220 = scmp.eq.s32.totalorder %s30, 0
      %p221 = por %p219, %p220
      %p222 = scmp.ne.s32.totalorder %s214, %s216
      %p223 = scmp.eq.s32.totalorder %s35, 1
      %p224 = por %p222, %p223
      %p225 = scmp.ne.s32.totalorder %s216, %s217
      %p226 = scmp.eq.s32.totalorder %s35, 0
      %p227 = por %p225, %p226
      %p228 = scmp.ne.s32.totalorder %s216, %s217
      %p229 = scmp.eq.s32.totalorder %s36, 1
      %p230 = por %p228, %p229
      %p232 = scmp.ne.s32.totalorder %s217, %s231
      %p233 = scmp.eq.s32.totalorder %s36, 0
      %p234 = por %p232, %p233
      %s236 = sadd.s32 %s235, 1
      %p239 = scmp.eq.s32.totalorder %s30, 1
      %p240 = scmp.ne.s32.totalorder %s235, %s237
      %p241 = scmp.eq.s32.totalorder %s30, 0
      %p242 = por %p240, %p241
      %p243 = scmp.ne.s32.totalorder %s235, %s237
      %p244 = scmp.eq.s32.totalorder %s35, 1
      %p245 = por %p243, %p244
      %p246 = scmp.ne.s32.totalorder %s237, %s238
      %p247 = scmp.eq.s32.totalorder %s35, 0
      %p248 = por %p246, %p247
      %p249 = scmp.ne.s32.totalorder %s237, %s238
      %p250 = scmp.eq.s32.totalorder %s36, 1
      %p251 = por %p249, %p250
      %p253 = scmp.ne.s32.totalorder %s238, %s252
      %p254 = scmp.eq.s32.totalorder %s36, 0
      %p255 = por %p253, %p254
      %s257 = sadd.s32 %s256, 1
      %p260 = scmp.eq.s32.totalorder %s30, 1
      %p261 = scmp.ne.s32.totalorder %s256, %s258
      %p262 = scmp.eq.s32.totalorder %s30, 0
      %p263 = por %p261, %p262
      %p264 = scmp.ne.s32.totalorder %s256, %s258
      %p265 = scmp.eq.s32.totalorder %s35, 1
      %p266 = por %p264, %p265
      %p267 = scmp.ne.s32.totalorder %s258, %s259
      %p268 = scmp.eq.s32.totalorder %s35, 0
      %p269 = por %p267, %p268
      %p270 = scmp.ne.s32.totalorder %s258, %s259
      %p271 = scmp.eq.s32.totalorder %s36, 1
      %p272 = por %p270, %p271
      %p274 = scmp.ne.s32.totalorder %s259, %s273
      %p275 = scmp.eq.s32.totalorder %s36, 0
      %p276 = por %p274, %p275
      %s278 = sadd.s32 %s277, 1
      %p281 = scmp.eq.s32.totalorder %s30, 1
      %p282 = scmp.ne.s32.totalorder %s277, %s279
      %p283 = scmp.eq.s32.totalorder %s30, 0
      %p284 = por %p282, %p283
      %p285 = scmp.ne.s32.totalorder %s277, %s279
      %p286 = scmp.eq.s32.totalorder %s35, 1
      %p287 = por %p285, %p286
      %p288 = scmp.ne.s32.totalorder %s279, %s280
      %p289 = scmp.eq.s32.totalorder %s35, 0
      %p290 = por %p288, %p289
      %p291 = scmp.ne.s32.totalorder %s279, %s280
      %p292 = scmp.eq.s32.totalorder %s36, 1
      %p293 = por %p291, %p292
      %p295 = scmp.ne.s32.totalorder %s280, %s294
      %p296 = scmp.eq.s32.totalorder %s36, 0
      %p297 = por %p295, %p296
      %s298 = ssub.s32 %s37, %s49
      %s299 = ssub.s32 %s38, %s45
      %s300 = sor.u32 %s298, %s299
      %p301 = scmp.eq.s32.totalorder %s300, 0
      %s303 = sadd.s32 %s302, 1
      %s304 = scalar_select %p301, %s302, %s303
      %p307 = pneg %p301
      %p308 = scmp.eq.s32.totalorder %s30, 1
      %p309 = por %p307, %p308
      %p310 = scmp.ne.s32.totalorder %s302, %s305
      %p311 = scmp.eq.s32.totalorder %s30, 0
      %p312 = por %p310, %p311
      %p313 = scmp.ne.s32.totalorder %s302, %s305
      %p314 = scmp.eq.s32.totalorder %s35, 1
      %p315 = por %p313, %p314
      %p316 = scmp.ne.s32.totalorder %s305, %s306
      %p317 = scmp.eq.s32.totalorder %s35, 0
      %p318 = por %p316, %p317
      %p319 = scmp.ne.s32.totalorder %s305, %s306
      %p320 = scmp.eq.s32.totalorder %s36, 1
      %p321 = por %p319, %p320
      %p323 = scmp.ne.s32.totalorder %s306, %s322
      %p324 = scmp.eq.s32.totalorder %s36, 0
      %p325 = por %p323, %p324
      %p326 = scmp.le.s32.totalorder 1, %s30
      %p327 = scmp.lt.s32.totalorder %s30, 3
      %p328 = pnand %p326, %p327
      %p329 = pneg %p328
      // Predicated region
      $region9: #{tpu_custom_call.1} parent=5 // pred_check
        _
      $region10: #{tpu_custom_call.1} parent=5 // pred_check_branch
        %331 = sbr.rel (%p328) target = $region12
      $region11: #{tpu_custom_call.1} parent=5 // pred_region
        %s332 = ssub.s32 %s30, 1
        // Predicated region
        $region13: #{tpu_custom_call.1} parent=11 // pred_check
          %p333 = pneg %p143
        $region14: #{tpu_custom_call.1} parent=11 // pred_check_branch
          %335 = sbr.rel (%p333) target = $region16
        $region15: #{tpu_custom_call.1} parent=11 // pred_region
          %s337 = ssub.s32 512, 512
          %338 = vsyncadd [#allocation10], %s337
          %s339 = sshll.u32 [#allocation9], 4
          %s340 = int_to_ptr.vmem [resolvable:$true] %s339
          %345 = dma.hbm_to_vmem [thread:$0]  %s3, 512, %s340, [#allocation10], 128, 128, 8
        $region16: #{tpu_custom_call.1} parent=11 // pred_fallthru
          _
        // Predicated region
        $region17: #{tpu_custom_call.1} parent=11 // pred_check
          %p346 = pneg %p164
        $region18: #{tpu_custom_call.1} parent=11 // pred_check_branch
          %348 = sbr.rel (%p346) target = $region20
        $region19: #{tpu_custom_call.1} parent=11 // pred_region
          %s350 = ssub.s32 16, 16
          %351 = vsyncadd [#allocation10], %s350
          %s353 = sshll.u32 [#allocation11], 4
          %s354 = int_to_ptr.vmem [resolvable:$true] %s353
          %356 = dma.hbm_to_vmem [thread:$0]  %s4, 16, %s354, [#allocation10]
        $region20: #{tpu_custom_call.1} parent=11 // pred_fallthru
          _
        // Predicated region
        $region21: #{tpu_custom_call.1} parent=11 // pred_check
          %p357 = pneg %p185
        $region22: #{tpu_custom_call.1} parent=11 // pred_check_branch
          %359 = sbr.rel (%p357) target = $region24
        $region23: #{tpu_custom_call.1} parent=11 // pred_region
          %s361 = ssub.s32 512, 512
          %362 = vsyncadd [#allocation13], %s361
          %s363 = sshll.u32 [#allocation12], 4
          %s364 = int_to_ptr.vmem [resolvable:$true] %s363
          %369 = dma.hbm_to_vmem [thread:$0]  %s5, 512, %s364, [#allocation13], 128, 128, 8
        $region24: #{tpu_custom_call.1} parent=11 // pred_fallthru
          _
        // Predicated region
        $region25: #{tpu_custom_call.1} parent=11 // pred_check
          %p370 = pneg %p206
        $region26: #{tpu_custom_call.1} parent=11 // pred_check_branch
          %372 = sbr.rel (%p370) target = $region28
        $region27: #{tpu_custom_call.1} parent=11 // pred_region
          %s374 = ssub.s32 16, 16
          %375 = vsyncadd [#allocation13], %s374
          %s377 = sshll.u32 [#allocation14], 4
          %s378 = int_to_ptr.vmem [resolvable:$true] %s377
          %380 = dma.hbm_to_vmem [thread:$0]  %s6, 16, %s378, [#allocation13]
        $region28: #{tpu_custom_call.1} parent=11 // pred_fallthru
          _
        // Predicated region
        $region29: #{tpu_custom_call.1} parent=11 // pred_check
          %p381 = pneg %p227
        $region30: #{tpu_custom_call.1} parent=11 // pred_check_branch
          %383 = sbr.rel (%p381) target = $region32
        $region31: #{tpu_custom_call.1} parent=11 // pred_region
          %s385 = ssub.s32 512, 512
          %386 = vsyncadd [#allocation16], %s385
          %s387 = sshll.u32 [#allocation15], 4
          %s388 = int_to_ptr.vmem [resolvable:$true] %s387
          %393 = dma.hbm_to_vmem [thread:$0]  %s7, 512, %s388, [#allocation16], 128, 128, 8
        $region32: #{tpu_custom_call.1} parent=11 // pred_fallthru
          _
        // Predicated region
        $region33: #{tpu_custom_call.1} parent=11 // pred_check
          %p394 = pneg %p248
        $region34: #{tpu_custom_call.1} parent=11 // pred_check_branch
          %396 = sbr.rel (%p394) target = $region36
        $region35: #{tpu_custom_call.1} parent=11 // pred_region
          %s398 = ssub.s32 16, 16
          %399 = vsyncadd [#allocation16], %s398
          %s401 = sshll.u32 [#allocation17], 4
          %s402 = int_to_ptr.vmem [resolvable:$true] %s401
          %404 = dma.hbm_to_vmem [thread:$0]  %s8, 16, %s402, [#allocation16]
        $region36: #{tpu_custom_call.1} parent=11 // pred_fallthru
          _
        // Predicated region
        $region37: #{tpu_custom_call.1} parent=11 // pred_check
          %p405 = pneg %p269
        $region38: #{tpu_custom_call.1} parent=11 // pred_check_branch
          %407 = sbr.rel (%p405) target = $region40
        $region39: #{tpu_custom_call.1} parent=11 // pred_region
          %s409 = ssub.s32 512, 512
          %410 = vsyncadd [#allocation19], %s409
          %s411 = sshll.u32 [#allocation18], 4
          %s412 = int_to_ptr.vmem [resolvable:$true] %s411
          %417 = dma.hbm_to_vmem [thread:$0]  %s9, 512, %s412, [#allocation19], 128, 128, 8
        $region40: #{tpu_custom_call.1} parent=11 // pred_fallthru
          _
        // Predicated region
        $region41: #{tpu_custom_call.1} parent=11 // pred_check
          %p418 = pneg %p290
        $region42: #{tpu_custom_call.1} parent=11 // pred_check_branch
          %420 = sbr.rel (%p418) target = $region44
        $region43: #{tpu_custom_call.1} parent=11 // pred_region
          %s422 = ssub.s32 16, 16
          %423 = vsyncadd [#allocation19], %s422
          %s425 = sshll.u32 [#allocation20], 4
          %s426 = int_to_ptr.vmem [resolvable:$true] %s425
          %428 = dma.hbm_to_vmem [thread:$0]  %s10, 16, %s426, [#allocation19]
        $region44: #{tpu_custom_call.1} parent=11 // pred_fallthru
          _
      $region12: #{tpu_custom_call.1} parent=5 // pred_fallthru
        _
      %p429 = scmp.lt.s32.totalorder %s30, 2
      // Predicated region
      $region45: #{tpu_custom_call.1} parent=5 // pred_check
        %p430 = pneg %p429
      $region46: #{tpu_custom_call.1} parent=5 // pred_check_branch
        %432 = sbr.rel (%p430) target = $region48
      $region47: #{tpu_custom_call.1} parent=5 // pred_region
        // Predicated region
        $region49: #{tpu_custom_call.1} parent=47 // pred_check
          %p433 = pneg %p64
        $region50: #{tpu_custom_call.1} parent=47 // pred_check_branch
          %435 = sbr.rel (%p433) target = $region52
        $region51: #{tpu_custom_call.1} parent=47 // pred_region
          %s436 = sand.u32 %s54, 1
          %s437 = scalar_lea.sflag [#allocation4], %s436
          %s438 = sand.u32 %s54, 1
          %s439 = smul.addr %s438, 8
          %s440 = scalar_lea.vmem [#allocation3], %s439
          %s442 = ssub.s32 128, 128
          %443 = vsyncadd %s437, %s442
          %s444 = sadd.s32 %s38, %s37
          %s445 = smul.addr %s444, 128
          %s446 = scalar_lea.hbm %s0, %s445
          %s448 = sshll.u32 %s440, 4
          %s449 = int_to_ptr.vmem [resolvable:$true] %s448
          %451 = dma.hbm_to_vmem [thread:$0]  %s446, 128, %s449, %s437
        $region52: #{tpu_custom_call.1} parent=47 // pred_fallthru
          _
        // Predicated region
        $region53: #{tpu_custom_call.1} parent=47 // pred_check
          %p452 = pneg %p90
        $region54: #{tpu_custom_call.1} parent=47 // pred_check_branch
          %454 = sbr.rel (%p452) target = $region56
        $region55: #{tpu_custom_call.1} parent=47 // pred_region
          %s455 = sand.u32 %s30, 1
          %s456 = scalar_lea.sflag [#allocation7], %s455
          %s457 = sand.u32 %s80, 1
          %s458 = smul.addr %s457, 8
          %s459 = scalar_lea.vmem [#allocation6], %s458
          %s461 = ssub.s32 128, 128
          %462 = vsyncadd %s456, %s461
          %s463 = smul.addr %s37, 128
          %s464 = scalar_lea.hbm %s1, %s463
          %s466 = sshll.u32 %s459, 4
          %s467 = int_to_ptr.vmem [resolvable:$true] %s466
          %469 = dma.hbm_to_vmem [thread:$0]  %s464, 128, %s467, %s456
        $region56: #{tpu_custom_call.1} parent=47 // pred_fallthru
          _
        // Predicated region
        $region57: #{tpu_custom_call.1} parent=47 // pred_check
          %p470 = pneg %p116
        $region58: #{tpu_custom_call.1} parent=47 // pred_check_branch
          %472 = sbr.rel (%p470) target = $region60
        $region59: #{tpu_custom_call.1} parent=47 // pred_region
          %s473 = sand.u32 %s30, 1
          %s474 = scalar_lea.sflag [#allocation7], %s473
          %s475 = sand.u32 %s106, 1
          %s476 = smul.addr %s475, 8
          %s477 = scalar_lea.vmem [#allocation8], %s476
          %s479 = ssub.s32 128, 128
          %480 = vsyncadd %s474, %s479
          %s481 = smul.addr %s37, 128
          %s482 = scalar_lea.hbm %s2, %s481
          %s484 = sshll.u32 %s477, 4
          %s485 = int_to_ptr.vmem [resolvable:$true] %s484
          %487 = dma.hbm_to_vmem [thread:$0]  %s482, 128, %s485, %s474
        $region60: #{tpu_custom_call.1} parent=47 // pred_fallthru
          _
      $region48: #{tpu_custom_call.1} parent=5 // pred_fallthru
        _
      %p488 = scmp.le.s32.totalorder 1, %s30
      %p489 = scmp.lt.s32.totalorder %s30, 3
      %p490 = pnand %p488, %p489
      %p491 = pneg %p490
      // Predicated region
      $region61: #{tpu_custom_call.1} parent=5 // pred_check
        _
      $region62: #{tpu_custom_call.1} parent=5 // pred_check_branch
        %493 = sbr.rel (%p490) target = $region64
      $region63: #{tpu_custom_call.1} parent=5 // pred_region
        %s494 = ssub.s32 %s30, 1
        %s495 = sand.u32 %s57, 1
        %s496 = scalar_lea.sflag [#allocation4], %s495
        %s497 = sand.u32 %s57, 1
        %s498 = smul.addr %s497, 8
        %s499 = scalar_lea.vmem [#allocation3], %s498
        // Predicated region
        $region65: #{tpu_custom_call.1} parent=63 // pred_check
          %p500 = pneg %p70
        $region66: #{tpu_custom_call.1} parent=63 // pred_check_branch
          %502 = sbr.rel (%p500) target = $region68
        $region67: #{tpu_custom_call.1} parent=63 // pred_region
          %503 = dma.done %s496, 128
        $region68: #{tpu_custom_call.1} parent=63 // pred_fallthru
          _
        %s504 = sand.u32 %s35, 1
        %s505 = scalar_lea.sflag [#allocation7], %s504
        %s506 = sand.u32 %s83, 1
        %s507 = smul.addr %s506, 8
        %s508 = scalar_lea.vmem [#allocation6], %s507
        // Predicated region
        $region69: #{tpu_custom_call.1} parent=63 // pred_check
          %p509 = pneg %p96
        $region70: #{tpu_custom_call.1} parent=63 // pred_check_branch
          %511 = sbr.rel (%p509) target = $region72
        $region71: #{tpu_custom_call.1} parent=63 // pred_region
          %512 = dma.done %s505, 128
        $region72: #{tpu_custom_call.1} parent=63 // pred_fallthru
          _
        %s513 = sand.u32 %s35, 1
        %s514 = scalar_lea.sflag [#allocation7], %s513
        %s515 = sand.u32 %s109, 1
        %s516 = smul.addr %s515, 8
        %s517 = scalar_lea.vmem [#allocation8], %s516
        // Predicated region
        $region73: #{tpu_custom_call.1} parent=63 // pred_check
          %p518 = pneg %p122
        $region74: #{tpu_custom_call.1} parent=63 // pred_check_branch
          %520 = sbr.rel (%p518) target = $region76
        $region75: #{tpu_custom_call.1} parent=63 // pred_region
          %521 = dma.done %s514, 128
        $region76: #{tpu_custom_call.1} parent=63 // pred_fallthru
          _
        // Predicated region
        $region77: #{tpu_custom_call.1} parent=63 // pred_check
          %p522 = pneg %p143
        $region78: #{tpu_custom_call.1} parent=63 // pred_check_branch
          %524 = sbr.rel (%p522) target = $region80
        $region79: #{tpu_custom_call.1} parent=63 // pred_region
          %525 = dma.done [#allocation10], 512
        $region80: #{tpu_custom_call.1} parent=63 // pred_fallthru
          _
        // Predicated region
        $region81: #{tpu_custom_call.1} parent=63 // pred_check
          %p526 = pneg %p164
        $region82: #{tpu_custom_call.1} parent=63 // pred_check_branch
          %528 = sbr.rel (%p526) target = $region84
        $region83: #{tpu_custom_call.1} parent=63 // pred_region
          %529 = dma.done [#allocation10], 16
        $region84: #{tpu_custom_call.1} parent=63 // pred_fallthru
          _
        // Predicated region
        $region85: #{tpu_custom_call.1} parent=63 // pred_check
          %p530 = pneg %p185
        $region86: #{tpu_custom_call.1} parent=63 // pred_check_branch
          %532 = sbr.rel (%p530) target = $region88
        $region87: #{tpu_custom_call.1} parent=63 // pred_region
          %533 = dma.done [#allocation13], 512
        $region88: #{tpu_custom_call.1} parent=63 // pred_fallthru
          _
        // Predicated region
        $region89: #{tpu_custom_call.1} parent=63 // pred_check
          %p534 = pneg %p206
        $region90: #{tpu_custom_call.1} parent=63 // pred_check_branch
          %536 = sbr.rel (%p534) target = $region92
        $region91: #{tpu_custom_call.1} parent=63 // pred_region
          %537 = dma.done [#allocation13], 16
        $region92: #{tpu_custom_call.1} parent=63 // pred_fallthru
          _
        // Predicated region
        $region93: #{tpu_custom_call.1} parent=63 // pred_check
          %p538 = pneg %p227
        $region94: #{tpu_custom_call.1} parent=63 // pred_check_branch
          %540 = sbr.rel (%p538) target = $region96
        $region95: #{tpu_custom_call.1} parent=63 // pred_region
          %541 = dma.done [#allocation16], 512
        $region96: #{tpu_custom_call.1} parent=63 // pred_fallthru
          _
        // Predicated region
        $region97: #{tpu_custom_call.1} parent=63 // pred_check
          %p542 = pneg %p248
        $region98: #{tpu_custom_call.1} parent=63 // pred_check_branch
          %544 = sbr.rel (%p542) target = $region100
        $region99: #{tpu_custom_call.1} parent=63 // pred_region
          %545 = dma.done [#allocation16], 16
        $region100: #{tpu_custom_call.1} parent=63 // pred_fallthru
          _
        // Predicated region
        $region101: #{tpu_custom_call.1} parent=63 // pred_check
          %p546 = pneg %p269
        $region102: #{tpu_custom_call.1} parent=63 // pred_check_branch
          %548 = sbr.rel (%p546) target = $region104
        $region103: #{tpu_custom_call.1} parent=63 // pred_region
          %549 = dma.done [#allocation19], 512
        $region104: #{tpu_custom_call.1} parent=63 // pred_fallthru
          _
        // Predicated region
        $region105: #{tpu_custom_call.1} parent=63 // pred_check
          %p550 = pneg %p290
        $region106: #{tpu_custom_call.1} parent=63 // pred_check_branch
          %552 = sbr.rel (%p550) target = $region108
        $region107: #{tpu_custom_call.1} parent=63 // pred_region
          %553 = dma.done [#allocation19], 16
        $region108: #{tpu_custom_call.1} parent=63 // pred_fallthru
          _
        %s554 = sand.u32 %s57, 1
        %s555 = scalar_lea.sflag [#allocation4], %s554
        %s556 = sand.u32 %s57, 1
        %s557 = smul.addr %s556, 8
        %s558 = scalar_lea.vmem [#allocation3], %s557
        %p559 = pneg %p70
        %p560 = pneg %p67
        %s561 = sand.u32 %s35, 1
        %s562 = scalar_lea.sflag [#allocation7], %s561
        %s563 = sand.u32 %s83, 1
        %s564 = smul.addr %s563, 8
        %s565 = scalar_lea.vmem [#allocation6], %s564
        %p566 = pneg %p96
        %p567 = pneg %p93
        %s568 = sand.u32 %s35, 1
        %s569 = scalar_lea.sflag [#allocation7], %s568
        %s570 = sand.u32 %s109, 1
        %s571 = smul.addr %s570, 8
        %s572 = scalar_lea.vmem [#allocation8], %s571
        %p573 = pneg %p122
        %p574 = pneg %p119
        %p575 = pneg %p143
        %p576 = pneg %p140
        %p577 = pneg %p164
        %p578 = pneg %p161
        %p579 = pneg %p185
        %p580 = pneg %p182
        %p581 = pneg %p206
        %p582 = pneg %p203
        %p583 = pneg %p227
        %p584 = pneg %p224
        %p585 = pneg %p248
        %p586 = pneg %p245
        %p587 = pneg %p269
        %p588 = pneg %p266
        %p589 = pneg %p290
        %p590 = pneg %p287
        %p591 = pneg %p318
        %p592 = pneg %p315
        %s593 = sand.u32 %s305, 1
        %s594 = scalar_lea.sflag [#allocation5], %s593
        %s595 = sand.u32 %s305, 1
        %s596 = smul.addr %s595, 8
        %s597 = scalar_lea.vmem [#allocation21], %s596
        %v599 = vld [vmem:[%s499] sm:$0xff]
        %v600 = vpack.c.bf16 %v599, %v599
        %v601 = vld [vmem:[%s508] sm:$0xff]
        %v602 = vpack.c.bf16 %v601, %v601
        %v603 = vld [vmem:[%s517] sm:$0xff]
        %v604 = vpack.c.bf16 %v603, %v603
        %v605 = vld [vmem:[#allocation9] sm:$0xff]
        %v606 = vld [vmem:[#allocation9 + $0x8] sm:$0xff]
        %v607 = vld [vmem:[#allocation9 + $0x10] sm:$0xff]
        %v608 = vld [vmem:[#allocation9 + $0x18] sm:$0xff]
        %v609 = vpack.c.bf16 %v606, %v605
        %v610 = vpack.c.bf16 %v608, %v607
        %v611 = vld [vmem:[#allocation11] sm:$0x1]
        %v613 = vlaneseq
        %v614 = vshrl.u32 %v613, 7
        %v615 = vsub.s32 0, %v614
        %v616 = vrot.slane %v611, %v615
        %vm618 = vcmask 261120
        %v620 = vsel %vm618, %v600, 0
        %622 = vmatprep.subr.bf16.mxu0 0
        %623 = vmatpush1.bf16.msra.mxu0 %v609
        %624 = vmatprep.subr.bf16.mxu0 0
        %625 = vmatpush1.bf16.msra.mxu0 %v610
        %626 = vmatprep.subr.bf16.mxu0 0
        %627 = vmatpush1.bf16.msra.mxu0 0
        %628 = vmatprep.subr.bf16.mxu0 0
        %629 = vmatpush1.bf16.msra.mxu0 0
        %630 = vmatprep.subr.bf16.mxu0 0
        %631 = vmatpush1.bf16.msra.mxu0 0
        %632 = vmatprep.subr.bf16.mxu0 0
        %633 = vmatpush1.bf16.msra.mxu0 0
        %634 = vmatprep.subr.bf16.mxu0 0
        %635 = vmatpush1.bf16.msra.mxu0 0
        %636 = vmatprep.subr.bf16.mxu0 0
        %637 = vmatpush1.bf16.msra.mxu0 0
        %638 = vmatprep.subr.bf16.mxu0 0
        %639 = vmatpush1.bf16.msra.mxu0 0
        %640 = vmatprep.subr.bf16.mxu0 0
        %641 = vmatpush1.bf16.msra.mxu0 0
        %642 = vmatprep.subr.bf16.mxu0 0
        %643 = vmatpush1.bf16.msra.mxu0 0
        %644 = vmatprep.subr.bf16.mxu0 0
        %645 = vmatpush1.bf16.msra.mxu0 0
        %646 = vmatprep.subr.bf16.mxu0 0
        %647 = vmatpush1.bf16.msra.mxu0 0
        %648 = vmatprep.subr.bf16.mxu0 0
        %649 = vmatpush1.bf16.msra.mxu0 0
        %650 = vmatprep.subr.bf16.mxu0 0
        %651 = vmatpush1.bf16.msra.mxu0 0
        %652 = vmatprep.subr.bf16.mxu0 0
        %653 = vmatpush1.bf16.msra.mxu0 0
        %654 = vmatprep.mubr.bf16.mxu0 0
        %655 = vmatmul.mubr.bf16.gmra.mrb[0].mxu0 %v620
        %v656 = vpop.f32.mrb[0].mxu0
        %v657 = vadd.f32 %v616, %v656
        %v658 = vpop.f32.mrb[0].mxu0
        %v659 = vpop.f32.mrb[0].mxu0
        %v660 = vpop.f32.mrb[0].mxu0
        %661 = vdwg.mxu0
        %v662 = vld [vmem:[#allocation12] sm:$0xff]
        %v663 = vld [vmem:[#allocation12 + $0x8] sm:$0xff]
        %v664 = vld [vmem:[#allocation12 + $0x10] sm:$0xff]
        %v665 = vld [vmem:[#allocation12 + $0x18] sm:$0xff]
        %v666 = vpack.c.bf16 %v663, %v662
        %v667 = vpack.c.bf16 %v665, %v664
        %v668 = vld [vmem:[#allocation14] sm:$0x1]
        %v670 = vlaneseq
        %v671 = vshrl.u32 %v670, 7
        %v672 = vsub.s32 0, %v671
        %v673 = vrot.slane %v668, %v672
        %v676 = vsel %vm618, %v602, 0
        %678 = vmatprep.subr.bf16.mxu0 0
        %679 = vmatpush1.bf16.msra.mxu0 %v666
        %680 = vmatprep.subr.bf16.mxu0 0
        %681 = vmatpush1.bf16.msra.mxu0 %v667
        %682 = vmatprep.subr.bf16.mxu0 0
        %683 = vmatpush1.bf16.msra.mxu0 0
        %684 = vmatprep.subr.bf16.mxu0 0
        %685 = vmatpush1.bf16.msra.mxu0 0
        %686 = vmatprep.subr.bf16.mxu0 0
        %687 = vmatpush1.bf16.msra.mxu0 0
        %688 = vmatprep.subr.bf16.mxu0 0
        %689 = vmatpush1.bf16.msra.mxu0 0
        %690 = vmatprep.subr.bf16.mxu0 0
        %691 = vmatpush1.bf16.msra.mxu0 0
        %692 = vmatprep.subr.bf16.mxu0 0
        %693 = vmatpush1.bf16.msra.mxu0 0
        %694 = vmatprep.subr.bf16.mxu0 0
        %695 = vmatpush1.bf16.msra.mxu0 0
        %696 = vmatprep.subr.bf16.mxu0 0
        %697 = vmatpush1.bf16.msra.mxu0 0
        %698 = vmatprep.subr.bf16.mxu0 0
        %699 = vmatpush1.bf16.msra.mxu0 0
        %700 = vmatprep.subr.bf16.mxu0 0
        %701 = vmatpush1.bf16.msra.mxu0 0
        %702 = vmatprep.subr.bf16.mxu0 0
        %703 = vmatpush1.bf16.msra.mxu0 0
        %704 = vmatprep.subr.bf16.mxu0 0
        %705 = vmatpush1.bf16.msra.mxu0 0
        %706 = vmatprep.subr.bf16.mxu0 0
        %707 = vmatpush1.bf16.msra.mxu0 0
        %708 = vmatprep.subr.bf16.mxu0 0
        %709 = vmatpush1.bf16.msra.mxu0 0
        %710 = vmatprep.mubr.bf16.mxu0 0
        %711 = vmatmul.mubr.bf16.gmra.mrb[0].mxu0 %v676
        %v712 = vpop.f32.mrb[0].mxu0
        %v713 = vadd.f32 %v673, %v712
        %v714 = vpop.f32.mrb[0].mxu0
        %v715 = vpop.f32.mrb[0].mxu0
        %v716 = vpop.f32.mrb[0].mxu0
        %717 = vdwg.mxu0
        %v718 = vld [vmem:[#allocation15] sm:$0xff]
        %v719 = vld [vmem:[#allocation15 + $0x8] sm:$0xff]
        %v720 = vld [vmem:[#allocation15 + $0x10] sm:$0xff]
        %v721 = vld [vmem:[#allocation15 + $0x18] sm:$0xff]
        %v722 = vpack.c.bf16 %v719, %v718
        %v723 = vpack.c.bf16 %v721, %v720
        %v724 = vld [vmem:[#allocation17] sm:$0x1]
        %v726 = vlaneseq
        %v727 = vshrl.u32 %v726, 7
        %v728 = vsub.s32 0, %v727
        %v729 = vrot.slane %v724, %v728
        %v732 = vsel %vm618, %v604, 0
        %734 = vmatprep.subr.bf16.mxu0 0
        %735 = vmatpush1.bf16.msra.mxu0 %v722
        %736 = vmatprep.subr.bf16.mxu0 0
        %737 = vmatpush1.bf16.msra.mxu0 %v723
        %738 = vmatprep.subr.bf16.mxu0 0
        %739 = vmatpush1.bf16.msra.mxu0 0
        %740 = vmatprep.subr.bf16.mxu0 0
        %741 = vmatpush1.bf16.msra.mxu0 0
        %742 = vmatprep.subr.bf16.mxu0 0
        %743 = vmatpush1.bf16.msra.mxu0 0
        %744 = vmatprep.subr.bf16.mxu0 0
        %745 = vmatpush1.bf16.msra.mxu0 0
        %746 = vmatprep.subr.bf16.mxu0 0
        %747 = vmatpush1.bf16.msra.mxu0 0
        %748 = vmatprep.subr.bf16.mxu0 0
        %749 = vmatpush1.bf16.msra.mxu0 0
        %750 = vmatprep.subr.bf16.mxu0 0
        %751 = vmatpush1.bf16.msra.mxu0 0
        %752 = vmatprep.subr.bf16.mxu0 0
        %753 = vmatpush1.bf16.msra.mxu0 0
        %754 = vmatprep.subr.bf16.mxu0 0
        %755 = vmatpush1.bf16.msra.mxu0 0
        %756 = vmatprep.subr.bf16.mxu0 0
        %757 = vmatpush1.bf16.msra.mxu0 0
        %758 = vmatprep.subr.bf16.mxu0 0
        %759 = vmatpush1.bf16.msra.mxu0 0
        %760 = vmatprep.subr.bf16.mxu0 0
        %761 = vmatpush1.bf16.msra.mxu0 0
        %762 = vmatprep.subr.bf16.mxu0 0
        %763 = vmatpush1.bf16.msra.mxu0 0
        %764 = vmatprep.subr.bf16.mxu0 0
        %765 = vmatpush1.bf16.msra.mxu0 0
        %766 = vmatprep.mubr.bf16.mxu0 0
        %767 = vmatmul.mubr.bf16.gmra.mrb[0].mxu0 %v732
        %v768 = vpop.f32.mrb[0].mxu0
        %v769 = vadd.f32 %v729, %v768
        %v770 = vpop.f32.mrb[0].mxu0
        %v771 = vpop.f32.mrb[0].mxu0
        %v772 = vpop.f32.mrb[0].mxu0
        %773 = vdwg.mxu0
        %v774 = vpack.c.bf16 %v657, %v657
        %v775 = vpack.c.bf16 %v713, %v713
        %v776 = vpack.c.bf16 %v769, %v769
        %vm777 = vcmask 64512
        %v779 = vsel %vm777, %v774, 0
        %v782 = vsel %vm777, %v775, 0
        %784 = vmatprep.subr.bf16.mxu0 0
        %785 = vmatpush1.bf16.xpose.msra.mxu0 %v782
        %786 = vmatprep.subr.bf16.mxu0 0
        %787 = vmatpush1.bf16.xpose.msra.mxu0 0
        %788 = vmatprep.subr.bf16.mxu0 0
        %789 = vmatpush1.bf16.xpose.msra.mxu0 0
        %790 = vmatprep.subr.bf16.mxu0 0
        %791 = vmatpush1.bf16.xpose.msra.mxu0 0
        %792 = vmatprep.subr.bf16.mxu0 0
        %793 = vmatpush1.bf16.xpose.msra.mxu0 0
        %794 = vmatprep.subr.bf16.mxu0 0
        %795 = vmatpush1.bf16.xpose.msra.mxu0 0
        %796 = vmatprep.subr.bf16.mxu0 0
        %797 = vmatpush1.bf16.xpose.msra.mxu0 0
        %798 = vmatprep.subr.bf16.mxu0 0
        %799 = vmatpush1.bf16.xpose.msra.mxu0 0
        %800 = vmatprep.subr.bf16.mxu0 0
        %801 = vmatpush1.bf16.xpose.msra.mxu0 0
        %802 = vmatprep.subr.bf16.mxu0 0
        %803 = vmatpush1.bf16.xpose.msra.mxu0 0
        %804 = vmatprep.subr.bf16.mxu0 0
        %805 = vmatpush1.bf16.xpose.msra.mxu0 0
        %806 = vmatprep.subr.bf16.mxu0 0
        %807 = vmatpush1.bf16.xpose.msra.mxu0 0
        %808 = vmatprep.subr.bf16.mxu0 0
        %809 = vmatpush1.bf16.xpose.msra.mxu0 0
        %810 = vmatprep.subr.bf16.mxu0 0
        %811 = vmatpush1.bf16.xpose.msra.mxu0 0
        %812 = vmatprep.subr.bf16.mxu0 0
        %813 = vmatpush1.bf16.xpose.msra.mxu0 0
        %814 = vmatprep.subr.bf16.mxu0 0
        %815 = vmatpush1.bf16.xpose.msra.mxu0 0
        %816 = vmatprep.mubr.bf16.mxu0 0
        %817 = vmatmul.mubr.bf16.gmra.mrb[0].mxu0 %v779
        %v818 = vpop.f32.mrb[0].mxu0
        %v819 = vadd.f32 0.0, %v818
        %v820 = vpop.f32.mrb[0].mxu0
        %v821 = vpop.f32.mrb[0].mxu0
        %v822 = vpop.f32.mrb[0].mxu0
        %823 = vdwg.mxu0
        %v824 = vmul.f32 %v819, 0.35355338
        %v825 = vsel %vm777, %v824, -inf
        %826 = vmax.xlane.f32.xlu0 %v825
        %v827 = vpop.xlane.xlu0 %826
        %v828 = vsub.f32 %v824, %v827
        %v829 = vmul.f32 %v828, 1.442695
        %v830 = vpow.pop %v829
        %v831 = vsel %vm777, %v830, 0.0
        %832 = vadd.xlane.f32.xlu0 %v831
        %v833 = vpop.xlane.xlu0 %832
        %v834 = vrcp.pop %v833
        %v835 = vmul.f32 %v830, %v834
        %v836 = vpack.c.bf16 %v835, %v835
        %v838 = vsel %vm777, %v836, 0
        %vm840 = vcmask 1043456
        %v842 = vsel %vm840, %v776, 0
        %844 = vmatprep.subr.bf16.mxu0 0
        %845 = vmatpush1.bf16.msra.mxu0 %v842
        %846 = vmatprep.subr.bf16.mxu0 0
        %847 = vmatpush1.bf16.msra.mxu0 0
        %848 = vmatprep.subr.bf16.mxu0 0
        %849 = vmatpush1.bf16.msra.mxu0 0
        %850 = vmatprep.subr.bf16.mxu0 0
        %851 = vmatpush1.bf16.msra.mxu0 0
        %852 = vmatprep.subr.bf16.mxu0 0
        %853 = vmatpush1.bf16.msra.mxu0 0
        %854 = vmatprep.subr.bf16.mxu0 0
        %855 = vmatpush1.bf16.msra.mxu0 0
        %856 = vmatprep.subr.bf16.mxu0 0
        %857 = vmatpush1.bf16.msra.mxu0 0
        %858 = vmatprep.subr.bf16.mxu0 0
        %859 = vmatpush1.bf16.msra.mxu0 0
        %860 = vmatprep.subr.bf16.mxu0 0
        %861 = vmatpush1.bf16.msra.mxu0 0
        %862 = vmatprep.subr.bf16.mxu0 0
        %863 = vmatpush1.bf16.msra.mxu0 0
        %864 = vmatprep.subr.bf16.mxu0 0
        %865 = vmatpush1.bf16.msra.mxu0 0
        %866 = vmatprep.subr.bf16.mxu0 0
        %867 = vmatpush1.bf16.msra.mxu0 0
        %868 = vmatprep.subr.bf16.mxu0 0
        %869 = vmatpush1.bf16.msra.mxu0 0
        %870 = vmatprep.subr.bf16.mxu0 0
        %871 = vmatpush1.bf16.msra.mxu0 0
        %872 = vmatprep.subr.bf16.mxu0 0
        %873 = vmatpush1.bf16.msra.mxu0 0
        %874 = vmatprep.subr.bf16.mxu0 0
        %875 = vmatpush1.bf16.msra.mxu0 0
        %876 = vmatprep.mubr.bf16.mxu0 0
        %877 = vmatmul.mubr.bf16.gmra.mrb[0].mxu0 %v838
        %v878 = vpop.f32.mrb[0].mxu0
        %v879 = vadd.f32 0.0, %v878
        %v880 = vpop.f32.mrb[0].mxu0
        %v881 = vpop.f32.mrb[0].mxu0
        %v882 = vpop.f32.mrb[0].mxu0
        %883 = vdwg.mxu0
        %884 = vst.msk [vmem:[#allocation2] sm:$0xff] %vm777, %v879
        %886 = vrot.lane.b32.xlu0 %v774, 120
        %v887 = vpop.permute.xlu0 %886
        %889 = vrot.lane.b32.xlu0 %v775, 120
        %v890 = vpop.permute.xlu0 %889
        %v892 = vsel %vm777, %v887, 0
        %v895 = vsel %vm777, %v890, 0
        %897 = vmatprep.subr.bf16.mxu0 0
        %898 = vmatpush1.bf16.xpose.msra.mxu0 %v895
        %899 = vmatprep.subr.bf16.mxu0 0
        %900 = vmatpush1.bf16.xpose.msra.mxu0 0
        %901 = vmatprep.subr.bf16.mxu0 0
        %902 = vmatpush1.bf16.xpose.msra.mxu0 0
        %903 = vmatprep.subr.bf16.mxu0 0
        %904 = vmatpush1.bf16.xpose.msra.mxu0 0
        %905 = vmatprep.subr.bf16.mxu0 0
        %906 = vmatpush1.bf16.xpose.msra.mxu0 0
        %907 = vmatprep.subr.bf16.mxu0 0
        %908 = vmatpush1.bf16.xpose.msra.mxu0 0
        %909 = vmatprep.subr.bf16.mxu0 0
        %910 = vmatpush1.bf16.xpose.msra.mxu0 0
        %911 = vmatprep.subr.bf16.mxu0 0
        %912 = vmatpush1.bf16.xpose.msra.mxu0 0
        %913 = vmatprep.subr.bf16.mxu0 0
        %914 = vmatpush1.bf16.xpose.msra.mxu0 0
        %915 = vmatprep.subr.bf16.mxu0 0
        %916 = vmatpush1.bf16.xpose.msra.mxu0 0
        %917 = vmatprep.subr.bf16.mxu0 0
        %918 = vmatpush1.bf16.xpose.msra.mxu0 0
        %919 = vmatprep.subr.bf16.mxu0 0
        %920 = vmatpush1.bf16.xpose.msra.mxu0 0
        %921 = vmatprep.subr.bf16.mxu0 0
        %922 = vmatpush1.bf16.xpose.msra.mxu0 0
        %923 = vmatprep.subr.bf16.mxu0 0
        %924 = vmatpush1.bf16.xpose.msra.mxu0 0
        %925 = vmatprep.subr.bf16.mxu0 0
        %926 = vmatpush1.bf16.xpose.msra.mxu0 0
        %927 = vmatprep.subr.bf16.mxu0 0
        %928 = vmatpush1.bf16.xpose.msra.mxu0 0
        %929 = vmatprep.mubr.bf16.mxu0 0
        %930 = vmatmul.mubr.bf16.gmra.mrb[0].mxu0 %v892
        %v931 = vpop.f32.mrb[0].mxu0
        %v932 = vadd.f32 0.0, %v931
        %v933 = vpop.f32.mrb[0].mxu0
        %v934 = vpop.f32.mrb[0].mxu0
        %v935 = vpop.f32.mrb[0].mxu0
        %936 = vdwg.mxu0
        %v937 = vmul.f32 %v932, 0.35355338
        %v938 = vsel %vm777, %v937, -inf
        %939 = vmax.xlane.f32.xlu0 %v938
        %v940 = vpop.xlane.xlu0 %939
        %v941 = vsub.f32 %v937, %v940
        %v942 = vmul.f32 %v941, 1.442695
        %v943 = vpow.pop %v942
        %v944 = vsel %vm777, %v943, 0.0
        %945 = vadd.xlane.f32.xlu0 %v944
        %v946 = vpop.xlane.xlu0 %945
        %v947 = vrcp.pop %v946
        %v948 = vmul.f32 %v943, %v947
        %v949 = vpack.c.bf16 %v948, %v948
        %951 = vrot.lane.b32.xlu0 %v776, 120
        %v952 = vpop.permute.xlu0 %951
        %v954 = vsel %vm777, %v949, 0
        %v957 = vsel %vm840, %v952, 0
        %959 = vmatprep.subr.bf16.mxu0 0
        %960 = vmatpush1.bf16.msra.mxu0 %v957
        %961 = vmatprep.subr.bf16.mxu0 0
        %962 = vmatpush1.bf16.msra.mxu0 0
        %963 = vmatprep.subr.bf16.mxu0 0
        %964 = vmatpush1.bf16.msra.mxu0 0
        %965 = vmatprep.subr.bf16.mxu0 0
        %966 = vmatpush1.bf16.msra.mxu0 0
        %967 = vmatprep.subr.bf16.mxu0 0
        %968 = vmatpush1.bf16.msra.mxu0 0
        %969 = vmatprep.subr.bf16.mxu0 0
        %970 = vmatpush1.bf16.msra.mxu0 0
        %971 = vmatprep.subr.bf16.mxu0 0
        %972 = vmatpush1.bf16.msra.mxu0 0
        %973 = vmatprep.subr.bf16.mxu0 0
        %974 = vmatpush1.bf16.msra.mxu0 0
        %975 = vmatprep.subr.bf16.mxu0 0
        %976 = vmatpush1.bf16.msra.mxu0 0
        %977 = vmatprep.subr.bf16.mxu0 0
        %978 = vmatpush1.bf16.msra.mxu0 0
        %979 = vmatprep.subr.bf16.mxu0 0
        %980 = vmatpush1.bf16.msra.mxu0 0
        %981 = vmatprep.subr.bf16.mxu0 0
        %982 = vmatpush1.bf16.msra.mxu0 0
        %983 = vmatprep.subr.bf16.mxu0 0
        %984 = vmatpush1.bf16.msra.mxu0 0
        %985 = vmatprep.subr.bf16.mxu0 0
        %986 = vmatpush1.bf16.msra.mxu0 0
        %987 = vmatprep.subr.bf16.mxu0 0
        %988 = vmatpush1.bf16.msra.mxu0 0
        %989 = vmatprep.subr.bf16.mxu0 0
        %990 = vmatpush1.bf16.msra.mxu0 0
        %991 = vmatprep.mubr.bf16.mxu0 0
        %992 = vmatmul.mubr.bf16.gmra.mrb[0].mxu0 %v954
        %v993 = vpop.f32.mrb[0].mxu0
        %v994 = vadd.f32 0.0, %v993
        %v995 = vpop.f32.mrb[0].mxu0
        %v996 = vpop.f32.mrb[0].mxu0
        %v997 = vpop.f32.mrb[0].mxu0
        %998 = vdwg.mxu0
        %1000 = vrot.lane.b32.xlu0 %v994, 8
        %v1001 = vpop.permute.xlu0 %1000
        %vm1003 = vcmask 130112
        %1004 = vst.msk [vmem:[#allocation2] sm:$0xff] %vm1003, %v1001
        %1005 = vrot.lane.b32.xlu0 %v774, 112
        %v1006 = vpop.permute.xlu0 %1005
        %1007 = vrot.lane.b32.xlu0 %v775, 112
        %v1008 = vpop.permute.xlu0 %1007
        %v1010 = vsel %vm777, %v1006, 0
        %v1013 = vsel %vm777, %v1008, 0
        %1015 = vmatprep.subr.bf16.mxu0 0
        %1016 = vmatpush1.bf16.xpose.msra.mxu0 %v1013
        %1017 = vmatprep.subr.bf16.mxu0 0
        %1018 = vmatpush1.bf16.xpose.msra.mxu0 0
        %1019 = vmatprep.subr.bf16.mxu0 0
        %1020 = vmatpush1.bf16.xpose.msra.mxu0 0
        %1021 = vmatprep.subr.bf16.mxu0 0
        %1022 = vmatpush1.bf16.xpose.msra.mxu0 0
        %1023 = vmatprep.subr.bf16.mxu0 0
        %1024 = vmatpush1.bf16.xpose.msra.mxu0 0
        %1025 = vmatprep.subr.bf16.mxu0 0
        %1026 = vmatpush1.bf16.xpose.msra.mxu0 0
        %1027 = vmatprep.subr.bf16.mxu0 0
        %1028 = vmatpush1.bf16.xpose.msra.mxu0 0
        %1029 = vmatprep.subr.bf16.mxu0 0
        %1030 = vmatpush1.bf16.xpose.msra.mxu0 0
        %1031 = vmatprep.subr.bf16.mxu0 0
        %1032 = vmatpush1.bf16.xpose.msra.mxu0 0
        %1033 = vmatprep.subr.bf16.mxu0 0
        %1034 = vmatpush1.bf16.xpose.msra.mxu0 0
        %1035 = vmatprep.subr.bf16.mxu0 0
        %1036 = vmatpush1.bf16.xpose.msra.mxu0 0
        %1037 = vmatprep.subr.bf16.mxu0 0
        %1038 = vmatpush1.bf16.xpose.msra.mxu0 0
        %1039 = vmatprep.subr.bf16.mxu0 0
        %1040 = vmatpush1.bf16.xpose.msra.mxu0 0
        %1041 = vmatprep.subr.bf16.mxu0 0
        %1042 = vmatpush1.bf16.xpose.msra.mxu0 0
        %1043 = vmatprep.subr.bf16.mxu0 0
        %1044 = vmatpush1.bf16.xpose.msra.mxu0 0
        %1045 = vmatprep.subr.bf16.mxu0 0
        %1046 = vmatpush1.bf16.xpose.msra.mxu0 0
        %1047 = vmatprep.mubr.bf16.mxu0 0
        %1048 = vmatmul.mubr.bf16.gmra.mrb[0].mxu0 %v1010
        %v1049 = vpop.f32.mrb[0].mxu0
        %v1050 = vadd.f32 0.0, %v1049
        %v1051 = vpop.f32.mrb[0].mxu0
        %v1052 = vpop.f32.mrb[0].mxu0
        %v1053 = vpop.f32.mrb[0].mxu0
        %1054 = vdwg.mxu0
        %v1055 = vmul.f32 %v1050, 0.35355338
        %v1056 = vsel %vm777, %v1055, -inf
        %1057 = vmax.xlane.f32.xlu0 %v1056
        %v1058 = vpop.xlane.xlu0 %1057
        %v1059 = vsub.f32 %v1055, %v1058
        %v1060 = vmul.f32 %v1059, 1.442695
        %v1061 = vpow.pop %v1060
        %v1062 = vsel %vm777, %v1061, 0.0
        %1063 = vadd.xlane.f32.xlu0 %v1062
        %v1064 = vpop.xlane.xlu0 %1063
        %v1065 = vrcp.pop %v1064
        %v1066 = vmul.f32 %v1061, %v1065
        %v1067 = vpack.c.bf16 %v1066, %v1066
        %1068 = vrot.lane.b32.xlu0 %v776, 112
        %v1069 = vpop.permute.xlu0 %1068
        %v1071 = vsel %vm777, %v1067, 0
        %v1074 = vsel %vm840, %v1069, 0
        %1076 = vmatprep.subr.bf16.mxu0 0
        %1077 = vmatpush1.bf16.msra.mxu0 %v1074
        %1078 = vmatprep.subr.bf16.mxu0 0
        %1079 = vmatpush1.bf16.msra.mxu0 0
        %1080 = vmatprep.subr.bf16.mxu0 0
        %1081 = vmatpush1.bf16.msra.mxu0 0
        %1082 = vmatprep.subr.bf16.mxu0 0
        %1083 = vmatpush1.bf16.msra.mxu0 0
        %1084 = vmatprep.subr.bf16.mxu0 0
        %1085 = vmatpush1.bf16.msra.mxu0 0
        %1086 = vmatprep.subr.bf16.mxu0 0
        %1087 = vmatpush1.bf16.msra.mxu0 0
        %1088 = vmatprep.subr.bf16.mxu0 0
        %1089 = vmatpush1.bf16.msra.mxu0 0
        %1090 = vmatprep.subr.bf16.mxu0 0
        %1091 = vmatpush1.bf16.msra.mxu0 0
        %1092 = vmatprep.subr.bf16.mxu0 0
        %1093 = vmatpush1.bf16.msra.mxu0 0
        %1094 = vmatprep.subr.bf16.mxu0 0
        %1095 = vmatpush1.bf16.msra.mxu0 0
        %1096 = vmatprep.subr.bf16.mxu0 0
        %1097 = vmatpush1.bf16.msra.mxu0 0
        %1098 = vmatprep.subr.bf16.mxu0 0
        %1099 = vmatpush1.bf16.msra.mxu0 0
        %1100 = vmatprep.subr.bf16.mxu0 0
        %1101 = vmatpush1.bf16.msra.mxu0 0
        %1102 = vmatprep.subr.bf16.mxu0 0
        %1103 = vmatpush1.bf16.msra.mxu0 0
        %1104 = vmatprep.subr.bf16.mxu0 0
        %1105 = vmatpush1.bf16.msra.mxu0 0
        %1106 = vmatprep.subr.bf16.mxu0 0
        %1107 = vmatpush1.bf16.msra.mxu0 0
        %1108 = vmatprep.mubr.bf16.mxu0 0
        %1109 = vmatmul.mubr.bf16.gmra.mrb[0].mxu0 %v1071
        %v1110 = vpop.f32.mrb[0].mxu0
        %v1111 = vadd.f32 0.0, %v1110
        %v1112 = vpop.f32.mrb[0].mxu0
        %v1113 = vpop.f32.mrb[0].mxu0
        %v1114 = vpop.f32.mrb[0].mxu0
        %1115 = vdwg.mxu0
        %1117 = vrot.lane.b32.xlu0 %v1111, 16
        %v1118 = vpop.permute.xlu0 %1117
        %vm1120 = vcmask 195712
        %1121 = vst.msk [vmem:[#allocation2] sm:$0xff] %vm1120, %v1118
        %1122 = vrot.lane.b32.xlu0 %v774, 104
        %v1123 = vpop.permute.xlu0 %1122
        %1124 = vrot.lane.b32.xlu0 %v775, 104
        %v1125 = vpop.permute.xlu0 %1124
        %v1127 = vsel %vm777, %v1123, 0
        %v1130 = vsel %vm777, %v1125, 0
        %1132 = vmatprep.subr.bf16.mxu0 0
        %1133 = vmatpush1.bf16.xpose.msra.mxu0 %v1130
        %1134 = vmatprep.subr.bf16.mxu0 0
        %1135 = vmatpush1.bf16.xpose.msra.mxu0 0
        %1136 = vmatprep.subr.bf16.mxu0 0
        %1137 = vmatpush1.bf16.xpose.msra.mxu0 0
        %1138 = vmatprep.subr.bf16.mxu0 0
        %1139 = vmatpush1.bf16.xpose.msra.mxu0 0
        %1140 = vmatprep.subr.bf16.mxu0 0
        %1141 = vmatpush1.bf16.xpose.msra.mxu0 0
        %1142 = vmatprep.subr.bf16.mxu0 0
        %1143 = vmatpush1.bf16.xpose.msra.mxu0 0
        %1144 = vmatprep.subr.bf16.mxu0 0
        %1145 = vmatpush1.bf16.xpose.msra.mxu0 0
        %1146 = vmatprep.subr.bf16.mxu0 0
        %1147 = vmatpush1.bf16.xpose.msra.mxu0 0
        %1148 = vmatprep.subr.bf16.mxu0 0
        %1149 = vmatpush1.bf16.xpose.msra.mxu0 0
        %1150 = vmatprep.subr.bf16.mxu0 0
        %1151 = vmatpush1.bf16.xpose.msra.mxu0 0
        %1152 = vmatprep.subr.bf16.mxu0 0
        %1153 = vmatpush1.bf16.xpose.msra.mxu0 0
        %1154 = vmatprep.subr.bf16.mxu0 0
        %1155 = vmatpush1.bf16.xpose.msra.mxu0 0
        %1156 = vmatprep.subr.bf16.mxu0 0
        %1157 = vmatpush1.bf16.xpose.msra.mxu0 0
        %1158 = vmatprep.subr.bf16.mxu0 0
        %1159 = vmatpush1.bf16.xpose.msra.mxu0 0
        %1160 = vmatprep.subr.bf16.mxu0 0
        %1161 = vmatpush1.bf16.xpose.msra.mxu0 0
        %1162 = vmatprep.subr.bf16.mxu0 0
        %1163 = vmatpush1.bf16.xpose.msra.mxu0 0
        %1164 = vmatprep.mubr.bf16.mxu0 0
        %1165 = vmatmul.mubr.bf16.gmra.mrb[0].mxu0 %v1127
        %v1166 = vpop.f32.mrb[0].mxu0
        %v1167 = vadd.f32 0.0, %v1166
        %v1168 = vpop.f32.mrb[0].mxu0
        %v1169 = vpop.f32.mrb[0].mxu0
        %v1170 = vpop.f32.mrb[0].mxu0
        %1171 = vdwg.mxu0
        %v1172 = vmul.f32 %v1167, 0.35355338
        %v1173 = vsel %vm777, %v1172, -inf
        %1174 = vmax.xlane.f32.xlu0 %v1173
        %v1175 = vpop.xlane.xlu0 %1174
        %v1176 = vsub.f32 %v1172, %v1175
        %v1177 = vmul.f32 %v1176, 1.442695
        %v1178 = vpow.pop %v1177
        %v1179 = vsel %vm777, %v1178, 0.0
        %1180 = vadd.xlane.f32.xlu0 %v1179
        %v1181 = vpop.xlane.xlu0 %1180
        %v1182 = vrcp.pop %v1181
        %v1183 = vmul.f32 %v1178, %v1182
        %v1184 = vpack.c.bf16 %v1183, %v1183
        %1185 = vrot.lane.b32.xlu0 %v776, 104
        %v1186 = vpop.permute.xlu0 %1185
        %v1188 = vsel %vm777, %v1184, 0
        %v1191 = vsel %vm840, %v1186, 0
        %1193 = vmatprep.subr.bf16.mxu0 0
        %1194 = vmatpush1.bf16.msra.mxu0 %v1191
        %1195 = vmatprep.subr.bf16.mxu0 0
        %1196 = vmatpush1.bf16.msra.mxu0 0
        %1197 = vmatprep.subr.bf16.mxu0 0
        %1198 = vmatpush1.bf16.msra.mxu0 0
        %1199 = vmatprep.subr.bf16.mxu0 0
        %1200 = vmatpush1.bf16.msra.mxu0 0
        %1201 = vmatprep.subr.bf16.mxu0 0
        %1202 = vmatpush1.bf16.msra.mxu0 0
        %1203 = vmatprep.subr.bf16.mxu0 0
        %1204 = vmatpush1.bf16.msra.mxu0 0
        %1205 = vmatprep.subr.bf16.mxu0 0
        %1206 = vmatpush1.bf16.msra.mxu0 0
        %1207 = vmatprep.subr.bf16.mxu0 0
        %1208 = vmatpush1.bf16.msra.mxu0 0
        %1209 = vmatprep.subr.bf16.mxu0 0
        %1210 = vmatpush1.bf16.msra.mxu0 0
        %1211 = vmatprep.subr.bf16.mxu0 0
        %1212 = vmatpush1.bf16.msra.mxu0 0
        %1213 = vmatprep.subr.bf16.mxu0 0
        %1214 = vmatpush1.bf16.msra.mxu0 0
        %1215 = vmatprep.subr.bf16.mxu0 0
        %1216 = vmatpush1.bf16.msra.mxu0 0
        %1217 = vmatprep.subr.bf16.mxu0 0
        %1218 = vmatpush1.bf16.msra.mxu0 0
        %1219 = vmatprep.subr.bf16.mxu0 0
        %1220 = vmatpush1.bf16.msra.mxu0 0
        %1221 = vmatprep.subr.bf16.mxu0 0
        %1222 = vmatpush1.bf16.msra.mxu0 0
        %1223 = vmatprep.subr.bf16.mxu0 0
        %1224 = vmatpush1.bf16.msra.mxu0 0
        %1225 = vmatprep.mubr.bf16.mxu0 0
        %1226 = vmatmul.mubr.bf16.gmra.mrb[0].mxu0 %v1188
        %v1227 = vpop.f32.mrb[0].mxu0
        %v1228 = vadd.f32 0.0, %v1227
        %v1229 = vpop.f32.mrb[0].mxu0
        %v1230 = vpop.f32.mrb[0].mxu0
        %v1231 = vpop.f32.mrb[0].mxu0
        %1232 = vdwg.mxu0
        %1234 = vrot.lane.b32.xlu0 %v1228, 24
        %v1235 = vpop.permute.xlu0 %1234
        %vm1237 = vcmask 261312
        %1238 = vst.msk [vmem:[#allocation2] sm:$0xff] %vm1237, %v1235
        %v1239 = vld [vmem:[#allocation2] sm:$0xff]
        %v1240 = vpack.c.bf16 %v1239, %v1239
        %v1241 = vld [vmem:[#allocation18] sm:$0xff]
        %v1242 = vld [vmem:[#allocation18 + $0x8] sm:$0xff]
        %v1243 = vld [vmem:[#allocation18 + $0x10] sm:$0xff]
        %v1244 = vld [vmem:[#allocation18 + $0x18] sm:$0xff]
        %v1245 = vpack.c.bf16 %v1242, %v1241
        %v1246 = vpack.c.bf16 %v1244, %v1243
        %v1247 = vld [vmem:[#allocation20] sm:$0x1]
        %v1249 = vlaneseq
        %v1250 = vshrl.u32 %v1249, 7
        %v1251 = vsub.s32 0, %v1250
        %v1252 = vrot.slane %v1247, %v1251
        %v1255 = vsel %vm618, %v1240, 0
        %1257 = vmatprep.subr.bf16.mxu0 0
        %1258 = vmatpush1.bf16.msra.mxu0 %v1245
        %1259 = vmatprep.subr.bf16.mxu0 0
        %1260 = vmatpush1.bf16.msra.mxu0 %v1246
        %1261 = vmatprep.subr.bf16.mxu0 0
        %1262 = vmatpush1.bf16.msra.mxu0 0
        %1263 = vmatprep.subr.bf16.mxu0 0
        %1264 = vmatpush1.bf16.msra.mxu0 0
        %1265 = vmatprep.subr.bf16.mxu0 0
        %1266 = vmatpush1.bf16.msra.mxu0 0
        %1267 = vmatprep.subr.bf16.mxu0 0
        %1268 = vmatpush1.bf16.msra.mxu0 0
        %1269 = vmatprep.subr.bf16.mxu0 0
        %1270 = vmatpush1.bf16.msra.mxu0 0
        %1271 = vmatprep.subr.bf16.mxu0 0
        %1272 = vmatpush1.bf16.msra.mxu0 0
        %1273 = vmatprep.subr.bf16.mxu0 0
        %1274 = vmatpush1.bf16.msra.mxu0 0
        %1275 = vmatprep.subr.bf16.mxu0 0
        %1276 = vmatpush1.bf16.msra.mxu0 0
        %1277 = vmatprep.subr.bf16.mxu0 0
        %1278 = vmatpush1.bf16.msra.mxu0 0
        %1279 = vmatprep.subr.bf16.mxu0 0
        %1280 = vmatpush1.bf16.msra.mxu0 0
        %1281 = vmatprep.subr.bf16.mxu0 0
        %1282 = vmatpush1.bf16.msra.mxu0 0
        %1283 = vmatprep.subr.bf16.mxu0 0
        %1284 = vmatpush1.bf16.msra.mxu0 0
        %1285 = vmatprep.subr.bf16.mxu0 0
        %1286 = vmatpush1.bf16.msra.mxu0 0
        %1287 = vmatprep.subr.bf16.mxu0 0
        %1288 = vmatpush1.bf16.msra.mxu0 0
        %1289 = vmatprep.mubr.bf16.mxu0 0
        %1290 = vmatmul.mubr.bf16.gmra.mrb[0].mxu0 %v1255
        %v1291 = vpop.f32.mrb[0].mxu0
        %v1292 = vadd.f32 %v1252, %v1291
        %v1293 = vpop.f32.mrb[0].mxu0
        %v1294 = vpop.f32.mrb[0].mxu0
        %v1295 = vpop.f32.mrb[0].mxu0
        %1296 = vdwg.mxu0
        %1297 = vst.msk [vmem:[%s597] sm:$0xff] %vm618, %v1292
        %s1298 = sand.u32 %s305, 1
        %s1299 = scalar_lea.sflag [#allocation5], %s1298
        %s1300 = sand.u32 %s305, 1
        %s1301 = smul.addr %s1300, 8
        %s1302 = scalar_lea.vmem [#allocation21], %s1301
        // Predicated region
        $region109: #{tpu_custom_call.1} parent=63 // pred_check
          %p1303 = pneg %p315
        $region110: #{tpu_custom_call.1} parent=63 // pred_check_branch
          %1305 = sbr.rel (%p1303) target = $region112
        $region111: #{tpu_custom_call.1} parent=63 // pred_region
          %s1307 = ssub.s32 128, 128
          %1308 = vsyncadd %s1299, %s1307
          %s1309 = sadd.s32 %s40, %s39
          %s1310 = smul.addr %s1309, 128
          %s1311 = scalar_lea.hbm %s11, %s1310
          %s1313 = sshll.u32 %s1302, 4
          %s1314 = int_to_ptr.vmem [resolvable:$true] %s1313
          %1316 = dma.vmem_to_hbm [thread:$0]  %s1314, 128, %s1311, %s1299
        $region112: #{tpu_custom_call.1} parent=63 // pred_fallthru
          _
      $region64: #{tpu_custom_call.1} parent=5 // pred_fallthru
        _
      %p1317 = scmp.le.s32.totalorder 2, %s30
      // Predicated region
      $region113: #{tpu_custom_call.1} parent=5 // pred_check
        %p1318 = pneg %p1317
      $region114: #{tpu_custom_call.1} parent=5 // pred_check_branch
        %1320 = sbr.rel (%p1318) target = $region116
      $region115: #{tpu_custom_call.1} parent=5 // pred_region
        %s1321 = ssub.s32 %s30, 2
        // Predicated region
        $region117: #{tpu_custom_call.1} parent=115 // pred_check
          %p1322 = pneg %p321
        $region118: #{tpu_custom_call.1} parent=115 // pred_check_branch
          %1324 = sbr.rel (%p1322) target = $region120
        $region119: #{tpu_custom_call.1} parent=115 // pred_region
          %s1325 = sand.u32 %s306, 1
          %s1326 = scalar_lea.sflag [#allocation5], %s1325
          %s1327 = sand.u32 %s306, 1
          %s1328 = smul.addr %s1327, 8
          %s1329 = scalar_lea.vmem [#allocation21], %s1328
          %1330 = dma.done %s1326, 128
        $region120: #{tpu_custom_call.1} parent=115 // pred_fallthru
          _
      $region116: #{tpu_custom_call.1} parent=5 // pred_fallthru
        _
    $region6: #{tpu_custom_call.1} parent=1 // loop_footer
      %s34 = sadd.s32 1, %s30
    $region7: #{tpu_custom_call.1} parent=1 // loop_footer_branch
      %29 = sbr.rel target = $region3
    $region8: #{tpu_custom_call.1} parent=1 // loop_exit
      _
    %1331 = vsyncpa [#allocation4], 1
    %s1332 = scalar_lea.sflag [#allocation4], 1
    %1333 = vsyncpa %s1332, 1
    %1334 = vsyncpa [#allocation7], 1
    %s1335 = scalar_lea.sflag [#allocation7], 1
    %1336 = vsyncpa %s1335, 1
    %1337 = vsyncpa [#allocation10], 1
    %1338 = vsyncpa [#allocation13], 1
    %1339 = vsyncpa [#allocation16], 1
    %1340 = vsyncpa [#allocation19], 1
    %1341 = vsyncpa [#allocation5], 1
    %s1342 = scalar_lea.sflag [#allocation5], 1
    %1343 = vsyncpa %s1342, 1

</llo_original>
